<compile_context>
chip_gen: v7x
topology: tpu7x:2x2x1
jax: 0.10.0
libtpu: 0.0.40
codegen_flags: <defaults>
</compile_context>

<pallas_src>
from functools import partial

import jax
import jax.numpy as jnp
from jax import lax
from jax.experimental import pallas as pl
from jax.experimental.pallas import tpu as pltpu

# ---------------- configuration (small, consistent with the module) ----------
B = 2                 # batch_size
N = 64                # total number of points (N1 + N2), sorted by batch idx
C_BEV = 32            # num_bev_features  -> c_in (only 'bev' source)
H = W = 16            # BEV spatial size
C_OUT = 64            # model_cfg.NUM_OUTPUT_FEATURES
VOXEL_SIZE = (1.0, 1.0, 0.25)
PC_RANGE = (0.0, 0.0, -3.0, 16.0, 16.0, 1.0)
BEV_STRIDE = 1.0
BN_EPS = 1e-5

TILE_N = 128          # point tile (multiple of 8; lane axis of both matmuls' M)
TILE_BHW = 256        # reduction tile over the flattened B*H*W axis
LANE = 128            # channel padding target (lane-dense outputs)


def _round_up(x, m):
    return (x + m - 1) // m * m


# ------------------------------- Pallas kernel -------------------------------
def _voxel_group_all_kernel(pts_ref, bev_ref, w_ref, shift_ref,
                            feat_ref, fused_ref, *,
                            h, w, tile_bhw, inv_x, inv_y, x0r, y0r):
    k = pl.program_id(1)
    nk = pl.num_programs(1)

    # fp32 output block doubles as the accumulator (resident across the k axis).
    @pl.when(k == 0)
    def _init():
        feat_ref[...] = jnp.zeros_like(feat_ref)

    pts = pts_ref[...]                       # (TILE_N, 4): [bs_idx, x, y, z]
    bs = pts[:, 0:1]
    px = pts[:, 1:2]
    py = pts[:, 2:3]

    # grid coordinates (same math as interpolate_from_bev_features_stack)
    x_idx = (px - x0r) * inv_x               # (TILE_N, 1)
    y_idx = (py - y0r) * inv_y

    # bilinear_interpolate_torch semantics (clamp first, weights from clamped)
    x0 = jnp.floor(x_idx)
    x1 = x0 + 1.0
    y0 = jnp.floor(y_idx)
    y1 = y0 + 1.0
    x0c = jnp.clip(x0, 0.0, w - 1.0)
    x1c = jnp.clip(x1, 0.0, w - 1.0)
    y0c = jnp.clip(y0, 0.0, h - 1.0)
    y1c = jnp.clip(y1, 0.0, h - 1.0)

    wa = (x1c - x_idx) * (y1c - y_idx)
    wb = (x1c - x_idx) * (y_idx - y0c)
    wc = (x_idx - x0c) * (y1c - y_idx)
    wd = (x_idx - x0c) * (y_idx - y0c)

    bi = bs.astype(jnp.int32)
    x0i = x0c.astype(jnp.int32)
    x1i = x1c.astype(jnp.int32)
    y0i = y0c.astype(jnp.int32)
    y1i = y1c.astype(jnp.int32)
    # flat index, shifted into this BHW tile's local coordinates
    base = bi * (h * w) - k * tile_bhw
    idx_a = base + y0i * w + x0i             # (TILE_N, 1)
    idx_b = base + y1i * w + x0i
    idx_c = base + y0i * w + x1i
    idx_d = base + y1i * w + x1i

    tn = pts.shape[0]
    cols = lax.broadcasted_iota(jnp.int32, (tn, tile_bhw), 1)
    zero = jnp.zeros((), jnp.float32)
    # Sparse interpolation matrix for this BHW tile (indices outside the tile
    # never match -> contribute nothing).  Duplicate corners at boundary clamps
    # sum their weights, exactly as the additive torch formulation.
    interp = (jnp.where(cols == idx_a, wa, zero)
              + jnp.where(cols == idx_b, wb, zero)
              + jnp.where(cols == idx_c, wc, zero)
              + jnp.where(cols == idx_d, wd, zero))

    # bf16 MXU matmul, fp32 accumulate into the resident output block.
    feat_ref[...] += jnp.dot(interp.astype(jnp.bfloat16), bev_ref[...],
                             preferred_element_type=jnp.float32)

    # Fusion head only once, after the last BHW reduction step.
    @pl.when(k == nk - 1)
    def _finalize():
        feat = feat_ref[...]                                  # (TILE_N, C_PAD)
        y = jnp.dot(feat.astype(jnp.bfloat16), w_ref[...],    # BN folded into w
                    preferred_element_type=jnp.float32)
        fused_ref[...] = jnp.maximum(y + shift_ref[...], 0.0)


# --------------------------------- wrapper -----------------------------------
def voxel_group_all_forward(points, spatial_features, lin_w,
                            bn_gamma, bn_beta, bn_mean, bn_var,
                            *, bev_stride=BEV_STRIDE,
                            tile_n=TILE_N, tile_bhw=TILE_BHW):
    """Returns (point_features_before_fusion (N, C_BEV), point_features (N, C_OUT))."""
    n = points.shape[0]
    b, c_bev, h, w = spatial_features.shape
    bhw = b * h * w

    # NCHW -> (B, H, W, C) -> (B*H*W, C), row-major so index = b*H*W + y*W + x.
    # Lane-dense bf16 slab: channels zero-padded to a multiple of 128.
    c_pad = _round_up(c_bev, LANE)
    bev = jnp.transpose(spatial_features, (0, 2, 3, 1)).reshape(bhw, c_bev)
    bev_p = jnp.pad(bev, ((0, 0), (0, c_pad - c_bev))).astype(jnp.bfloat16)

    # Fold BatchNorm (eval) into the linear weight: one-time parameter fold.
    c_out = lin_w.shape[0]
    c_out_pad = _round_up(c_out, LANE)
    scale = bn_gamma / jnp.sqrt(bn_var + BN_EPS)              # (1, C_OUT)
    shift = bn_beta - bn_mean * scale                         # (1, C_OUT)
    w_fold = lin_w.T * scale                                  # (C_BEV, C_OUT)
    w_p = jnp.pad(w_fold, ((0, c_pad - c_bev),
                           (0, c_out_pad - c_out))).astype(jnp.bfloat16)
    shift_p = jnp.pad(shift, ((0, 0), (0, c_out_pad - c_out))).astype(jnp.float32)

    # Pad points along N to a multiple of the point tile (padded rows map to
    # bs=0, x=y=0 -> a valid in-range corner; their outputs are sliced off).
    n_pad = _round_up(n, tile_n)
    pts_p = jnp.pad(points[:, :4].astype(jnp.float32), ((0, n_pad - n), (0, 0)))

    tile_bhw = min(tile_bhw, bhw)
    if bhw % tile_bhw != 0:
        tile_bhw = bhw

    kernel = partial(_voxel_group_all_kernel, h=h, w=w, tile_bhw=tile_bhw,
                     inv_x=1.0 / (VOXEL_SIZE[0] * float(bev_stride)),
                     inv_y=1.0 / (VOXEL_SIZE[1] * float(bev_stride)),
                     x0r=PC_RANGE[0], y0r=PC_RANGE[1])

    grid = (n_pad // tile_n, bhw // tile_bhw)

    feat_p, fused_p = pl.pallas_call(
        kernel,
        out_shape=(jax.ShapeDtypeStruct((n_pad, c_pad), jnp.float32),
                   jax.ShapeDtypeStruct((n_pad, c_out_pad), jnp.float32)),
        grid=grid,
        in_specs=[
            pl.BlockSpec((tile_n, 4), lambda i, k: (i, 0)),          # points
            pl.BlockSpec((tile_bhw, c_pad), lambda i, k: (k, 0)),    # bev slab
            pl.BlockSpec((c_pad, c_out_pad), lambda i, k: (0, 0)),   # folded W
            pl.BlockSpec((1, c_out_pad), lambda i, k: (0, 0)),       # shift
        ],
        out_specs=(
            pl.BlockSpec((tile_n, c_pad), lambda i, k: (i, 0)),      # feat (acc)
            pl.BlockSpec((tile_n, c_out_pad), lambda i, k: (i, 0)),  # fused
        ),
        compiler_params=pltpu.CompilerParams(
            dimension_semantics=("parallel", "arbitrary")),
    )(pts_p, bev_p, w_p, shift_p)

    # Unpad: lane-dense slabs -> module-shaped outputs.
    return feat_p[:n, :c_bev], fused_p[:n, :c_out]


# ----------------------------- pure-JAX references ---------------------------
def _reference_fp32(points, spatial_features, lin_w, g, bta, m, v, bev_stride):
    """Exact fp32 module math (gather-based bilinear interp + Linear/BN/ReLU)."""
    b, c_bev, h, w = spatial_features.shape
    im = jnp.transpose(spatial_features, (0, 2, 3, 1))        # (B, H, W, C)
    b_idx = points[:, 0].astype(jnp.int32)
    x = (points[:, 1] - PC_RANGE[0]) / VOXEL_SIZE[0] / bev_stride
    y = (points[:, 2] - PC_RANGE[1]) / VOXEL_SIZE[1] / bev_stride
    x0 = jnp.clip(jnp.floor(x).astype(jnp.int32), 0, w - 1)
    x1 = jnp.clip(jnp.floor(x).astype(jnp.int32) + 1, 0, w - 1)
    y0 = jnp.clip(jnp.floor(y).astype(jnp.int32), 0, h - 1)
    y1 = jnp.clip(jnp.floor(y).astype(jnp.int32) + 1, 0, h - 1)
    Ia, Ib = im[b_idx, y0, x0], im[b_idx, y1, x0]
    Ic, Id = im[b_idx, y0, x1], im[b_idx, y1, x1]
    wa = (x1 - x) * (y1 - y)
    wb = (x1 - x) * (y - y0)
    wc = (x - x0) * (y1 - y)
    wd = (x - x0) * (y - y0)
    feat = Ia * wa[:, None] + Ib * wb[:, None] + Ic * wc[:, None] + Id * wd[:, None]
    out = feat @ lin_w.T
    out = (out - m) * (g / jnp.sqrt(v + BN_EPS)) + bta
    return feat, jnp.maximum(out, 0.0)


def _reference_bf16(points, spatial_features, lin_w, g, bta, m, v, bev_stride):
    """Reference that mirrors the kernel's bf16 operand rounding (fp32 accumulate)."""
    b, c_bev, h, w = spatial_features.shape
    bhw = b * h * w
    bev = jnp.transpose(spatial_features, (0, 2, 3, 1)).reshape(bhw, c_bev)
    bev_bf = bev.astype(jnp.bfloat16).astype(jnp.float32)
    bs = points[:, 0].astype(jnp.int32)
    x = (points[:, 1] - PC_RANGE[0]) / VOXEL_SIZE[0] / bev_stride
    y = (points[:, 2] - PC_RANGE[1]) / VOXEL_SIZE[1] / bev_stride
    x0 = jnp.floor(x)
    x1 = x0 + 1.0
    y0 = jnp.floor(y)
    y1 = y0 + 1.0
    x0c = jnp.clip(x0, 0.0, w - 1.0)
    x1c = jnp.clip(x1, 0.0, w - 1.0)
    y0c = jnp.clip(y0, 0.0, h - 1.0)
    y1c = jnp.clip(y1, 0.0, h - 1.0)
    wa = (x1c - x) * (y1c - y)
    wb = (x1c - x) * (y - y0c)
    wc = (x - x0c) * (y1c - y)
    wd = (x - x0c) * (y - y0c)
    base = bs * (h * w)
    ia = base + y0c.astype(jnp.int32) * w + x0c.astype(jnp.int32)
    ib = base + y1c.astype(jnp.int32) * w + x0c.astype(jnp.int32)
    ic = base + y0c.astype(jnp.int32) * w + x1c.astype(jnp.int32)
    idd = base + y1c.astype(jnp.int32) * w + x1c.astype(jnp.int32)
    cols = jnp.arange(bhw)[None, :]
    interp = (jnp.where(cols == ia[:, None], wa[:, None], 0.0)
              + jnp.where(cols == ib[:, None], wb[:, None], 0.0)
              + jnp.where(cols == ic[:, None], wc[:, None], 0.0)
              + jnp.where(cols == idd[:, None], wd[:, None], 0.0))
    interp_bf = interp.astype(jnp.bfloat16).astype(jnp.float32)
    feat = interp_bf @ bev_bf
    scale = g / jnp.sqrt(v + BN_EPS)
    shift = bta - m * scale
    w_fold = (lin_w.T * scale).astype(jnp.bfloat16).astype(jnp.float32)
    fused = jnp.maximum(feat.astype(jnp.bfloat16).astype(jnp.float32) @ w_fold + shift, 0.0)
    return feat, fused


# ----------------------------------- main ------------------------------------
if __name__ == "__main__":
    key = jax.random.PRNGKey(0)
    k_xy, k_z, k_bev, k_w, k_g, k_b, k_m, k_v = jax.random.split(key, 8)

    # points: (N, 4) [bs_idx, x, y, z], pre-sorted by batch index
    bs_col = jnp.concatenate([jnp.zeros((N // 2, 1)), jnp.ones((N - N // 2, 1))],
                             axis=0).astype(jnp.float32)
    xy = jax.random.uniform(k_xy, (N, 2), jnp.float32, 0.5, 15.5)
    z = jax.random.uniform(k_z, (N, 1), jnp.float32, -2.5, 0.5)
    points = jnp.concatenate([bs_col, xy, z], axis=1)

    # spatial_features: NCHW, matching the PyTorch side
    spatial_features = jax.random.normal(k_bev, (B, C_BEV, H, W), jnp.float32)

    # deterministic synthetic parameters (no checkpoint load)
    lin_w = jax.random.normal(k_w, (C_OUT, C_BEV), jnp.float32) * 0.05  # nn.Linear (out, in)
    bn_gamma = 1.0 + 0.1 * jax.random.normal(k_g, (1, C_OUT), jnp.float32)
    bn_beta = 0.1 * jax.random.normal(k_b, (1, C_OUT), jnp.float32)
    bn_mean = 0.1 * jax.random.normal(k_m, (1, C_OUT), jnp.float32)
    bn_var = 1.0 + 0.1 * jax.random.uniform(k_v, (1, C_OUT), jnp.float32)

    feat, fused = voxel_group_all_forward(points, spatial_features, lin_w,
                                          bn_gamma, bn_beta, bn_mean, bn_var)
    jax.block_until_ready((feat, fused))

    # Tight check: kernel matches the same math with bf16 operand rounding.
    rb_feat, rb_fused = _reference_bf16(points, spatial_features, lin_w,
                                        bn_gamma, bn_beta, bn_mean, bn_var,
                                        BEV_STRIDE)
    assert jnp.allclose(feat, rb_feat, atol=2e-3, rtol=2e-3), "bev interp mismatch (bf16 ref)"
    assert jnp.allclose(fused, rb_fused, atol=2e-3, rtol=2e-3), "fusion mismatch (bf16 ref)"

    # Loose sanity check against the exact fp32 module math (bounds bf16
    # quantization; would catch any indexing / weight errors, which are O(1)).
    rf_feat, rf_fused = _reference_fp32(points, spatial_features, lin_w,
                                        bn_gamma, bn_beta, bn_mean, bn_var,
                                        BEV_STRIDE)
    assert jnp.allclose(feat, rf_feat, atol=1e-1, rtol=1e-1), "bev interp mismatch (fp32 ref)"
    assert jnp.allclose(fused, rf_fused, atol=1e-1, rtol=1e-1), "fusion mismatch (fp32 ref)"

    print("KERNEL_OK")
</pallas_src>

<mosaic_0001>
module attributes {stable_mosaic.version = 11 : i64} {
  func.func @_voxel_group_all_kernel(%arg0: i32, %arg1: i32, %arg2: memref<128x4xf32, #tpu.memory_space<vmem>>, %arg3: memref<256x128xbf16, #tpu.memory_space<vmem>>, %arg4: memref<128x128xbf16, #tpu.memory_space<vmem>>, %arg5: memref<1x128xf32, #tpu.memory_space<vmem>>, %arg6: memref<128x128xf32, #tpu.memory_space<vmem>>, %arg7: memref<128x128xf32, #tpu.memory_space<vmem>>) attributes {dimension_semantics = [#tpu.dimension_semantics<parallel>, #tpu.dimension_semantics<arbitrary>], iteration_bounds = array<i64: 1, 2>, scalar_prefetch = 0 : i64, scratch_operands = 0 : i64, tpu.core_type = #tpu.core_type<tc>, window_params = [{transform_indices = @transform_0, window_bounds = array<i64: 128, 4>}, {transform_indices = @transform_1, window_bounds = array<i64: 256, 128>}, {pipeline_mode = #tpu.pipeline_mode<synchronous>, transform_indices = @transform_2, window_bounds = array<i64: 128, 128>}, {pipeline_mode = #tpu.pipeline_mode<synchronous>, transform_indices = @transform_3, window_bounds = array<i64: 1, 128>}, {transform_indices = @transform_4, window_bounds = array<i64: 128, 128>}, {transform_indices = @transform_5, window_bounds = array<i64: 128, 128>}]} {
    %c0_i32 = arith.constant 0 : i32
    %0 = arith.cmpi eq, %arg1, %c0_i32 : i32
    %1 = arith.extui %0 : i1 to i32
    %c0_i32_0 = arith.constant 0 : i32
    %2 = arith.cmpi ne, %1, %c0_i32_0 : i32
    scf.if %2 {
      %cst_31 = arith.constant 0.000000e+00 : f32
      %112 = vector.broadcast %cst_31 : f32 to vector<128x128xf32>
      %c0_32 = arith.constant 0 : index
      %c0_33 = arith.constant 0 : index
      %113 = vector.load %arg6[%c0_32, %c0_33] : memref<128x128xf32, #tpu.memory_space<vmem>>, vector<128x128xf32>
      tpu.vector_store %arg6[%c0_32, %c0_33], %112 {strides = array<i32>} : memref<128x128xf32, #tpu.memory_space<vmem>>, vector<128x128xf32>,
    } else {
    }
    %c0 = arith.constant 0 : index
    %c0_1 = arith.constant 0 : index
    %3 = vector.load %arg2[%c0, %c0_1] : memref<128x4xf32, #tpu.memory_space<vmem>>, vector<128x4xf32>
    %4 = vector.extract_strided_slice %3 {offsets = [0, 0], sizes = [128, 1], strides = [1, 1]} : vector<128x4xf32> to vector<128x1xf32>
    %5 = vector.extract_strided_slice %3 {offsets = [0, 1], sizes = [128, 1], strides = [1, 1]} : vector<128x4xf32> to vector<128x1xf32>
    %6 = vector.extract_strided_slice %3 {offsets = [0, 2], sizes = [128, 1], strides = [1, 1]} : vector<128x4xf32> to vector<128x1xf32>
    %cst = arith.constant 0.000000e+00 : f32
    %7 = vector.broadcast %cst : f32 to vector<128x1xf32>
    %8 = arith.subf %5, %7 : vector<128x1xf32>
    %cst_2 = arith.constant 1.000000e+00 : f32
    %9 = vector.broadcast %cst_2 : f32 to vector<128x1xf32>
    %10 = arith.mulf %8, %9 : vector<128x1xf32>
    %cst_3 = arith.constant 0.000000e+00 : f32
    %11 = vector.broadcast %cst_3 : f32 to vector<128x1xf32>
    %12 = arith.subf %6, %11 : vector<128x1xf32>
    %cst_4 = arith.constant 1.000000e+00 : f32
    %13 = vector.broadcast %cst_4 : f32 to vector<128x1xf32>
    %14 = arith.mulf %12, %13 : vector<128x1xf32>
    %15 = math.floor %10 : vector<128x1xf32>
    %cst_5 = arith.constant 1.000000e+00 : f32
    %16 = vector.broadcast %cst_5 : f32 to vector<128x1xf32>
    %17 = arith.addf %15, %16 : vector<128x1xf32>
    %18 = math.floor %14 : vector<128x1xf32>
    %cst_6 = arith.constant 1.000000e+00 : f32
    %19 = vector.broadcast %cst_6 : f32 to vector<128x1xf32>
    %20 = arith.addf %18, %19 : vector<128x1xf32>
    %cst_7 = arith.constant 0.000000e+00 : f32
    %cst_8 = arith.constant 1.500000e+01 : f32
    %21 = vector.broadcast %cst_7 : f32 to vector<128x1xf32>
    %22 = arith.maximumf %21, %15 : vector<128x1xf32>
    %23 = vector.broadcast %cst_8 : f32 to vector<128x1xf32>
    %24 = arith.minimumf %23, %22 : vector<128x1xf32>
    %cst_9 = arith.constant 0.000000e+00 : f32
    %cst_10 = arith.constant 1.500000e+01 : f32
    %25 = vector.broadcast %cst_9 : f32 to vector<128x1xf32>
    %26 = arith.maximumf %25, %17 : vector<128x1xf32>
    %27 = vector.broadcast %cst_10 : f32 to vector<128x1xf32>
    %28 = arith.minimumf %27, %26 : vector<128x1xf32>
    %cst_11 = arith.constant 0.000000e+00 : f32
    %cst_12 = arith.constant 1.500000e+01 : f32
    %29 = vector.broadcast %cst_11 : f32 to vector<128x1xf32>
    %30 = arith.maximumf %29, %18 : vector<128x1xf32>
    %31 = vector.broadcast %cst_12 : f32 to vector<128x1xf32>
    %32 = arith.minimumf %31, %30 : vector<128x1xf32>
    %cst_13 = arith.constant 0.000000e+00 : f32
    %cst_14 = arith.constant 1.500000e+01 : f32
    %33 = vector.broadcast %cst_13 : f32 to vector<128x1xf32>
    %34 = arith.maximumf %33, %20 : vector<128x1xf32>
    %35 = vector.broadcast %cst_14 : f32 to vector<128x1xf32>
    %36 = arith.minimumf %35, %34 : vector<128x1xf32>
    %37 = arith.subf %28, %10 : vector<128x1xf32>
    %38 = arith.subf %36, %14 : vector<128x1xf32>
    %39 = arith.mulf %37, %38 : vector<128x1xf32>
    %40 = arith.subf %28, %10 : vector<128x1xf32>
    %41 = arith.subf %14, %32 : vector<128x1xf32>
    %42 = arith.mulf %40, %41 : vector<128x1xf32>
    %43 = arith.subf %10, %24 : vector<128x1xf32>
    %44 = arith.subf %36, %14 : vector<128x1xf32>
    %45 = arith.mulf %43, %44 : vector<128x1xf32>
    %46 = arith.subf %10, %24 : vector<128x1xf32>
    %47 = arith.subf %14, %32 : vector<128x1xf32>
    %48 = arith.mulf %46, %47 : vector<128x1xf32>
    %49 = arith.fptosi %4 : vector<128x1xf32> to vector<128x1xi32>
    %50 = arith.fptosi %24 : vector<128x1xf32> to vector<128x1xi32>
    %51 = arith.fptosi %28 : vector<128x1xf32> to vector<128x1xi32>
    %52 = arith.fptosi %32 : vector<128x1xf32> to vector<128x1xi32>
    %53 = arith.fptosi %36 : vector<128x1xf32> to vector<128x1xi32>
    %c256_i32 = arith.constant 256 : i32
    %54 = vector.broadcast %c256_i32 : i32 to vector<128x1xi32>
    %55 = arith.muli %49, %54 : vector<128x1xi32>
    %c256_i32_15 = arith.constant 256 : i32
    %56 = arith.muli %arg1, %c256_i32_15 : i32
    %57 = vector.broadcast %56 : i32 to vector<128x1xi32>
    %58 = arith.subi %55, %57 : vector<128x1xi32>
    %c16_i32 = arith.constant 16 : i32
    %59 = vector.broadcast %c16_i32 : i32 to vector<128x1xi32>
    %60 = arith.muli %52, %59 : vector<128x1xi32>
    %61 = arith.addi %58, %60 : vector<128x1xi32>
    %62 = arith.addi %61, %50 : vector<128x1xi32>
    %c16_i32_16 = arith.constant 16 : i32
    %63 = vector.broadcast %c16_i32_16 : i32 to vector<128x1xi32>
    %64 = arith.muli %53, %63 : vector<128x1xi32>
    %65 = arith.addi %58, %64 : vector<128x1xi32>
    %66 = arith.addi %65, %50 : vector<128x1xi32>
    %c16_i32_17 = arith.constant 16 : i32
    %67 = vector.broadcast %c16_i32_17 : i32 to vector<128x1xi32>
    %68 = arith.muli %52, %67 : vector<128x1xi32>
    %69 = arith.addi %58, %68 : vector<128x1xi32>
    %70 = arith.addi %69, %51 : vector<128x1xi32>
    %c16_i32_18 = arith.constant 16 : i32
    %71 = vector.broadcast %c16_i32_18 : i32 to vector<128x1xi32>
    %72 = arith.muli %53, %71 : vector<128x1xi32>
    %73 = arith.addi %58, %72 : vector<128x1xi32>
    %74 = arith.addi %73, %51 : vector<128x1xi32>
    %75 = tpu.iota {dimensions = array<i32: 1>} : vector<128x256xi32>
    %76 = vector.broadcast %62 : vector<128x1xi32> to vector<128x256xi32>
    %77 = arith.cmpi eq, %75, %76 : vector<128x256xi32>
    %cst_19 = arith.constant 0.000000e+00 : f32
    %78 = vector.shape_cast %39 : vector<128x1xf32> to vector<128x1xf32>
    %79 = vector.broadcast %78 : vector<128x1xf32> to vector<128x256xf32>
    %80 = vector.broadcast %cst_19 : f32 to vector<128x256xf32>
    %81 = arith.select %77, %79, %80 : vector<128x256xi1>, vector<128x256xf32>
    %82 = vector.broadcast %66 : vector<128x1xi32> to vector<128x256xi32>
    %83 = arith.cmpi eq, %75, %82 : vector<128x256xi32>
    %cst_20 = arith.constant 0.000000e+00 : f32
    %84 = vector.shape_cast %42 : vector<128x1xf32> to vector<128x1xf32>
    %85 = vector.broadcast %84 : vector<128x1xf32> to vector<128x256xf32>
    %86 = vector.broadcast %cst_20 : f32 to vector<128x256xf32>
    %87 = arith.select %83, %85, %86 : vector<128x256xi1>, vector<128x256xf32>
    %88 = arith.addf %81, %87 : vector<128x256xf32>
    %89 = vector.broadcast %70 : vector<128x1xi32> to vector<128x256xi32>
    %90 = arith.cmpi eq, %75, %89 : vector<128x256xi32>
    %cst_21 = arith.constant 0.000000e+00 : f32
    %91 = vector.shape_cast %45 : vector<128x1xf32> to vector<128x1xf32>
    %92 = vector.broadcast %91 : vector<128x1xf32> to vector<128x256xf32>
    %93 = vector.broadcast %cst_21 : f32 to vector<128x256xf32>
    %94 = arith.select %90, %92, %93 : vector<128x256xi1>, vector<128x256xf32>
    %95 = arith.addf %88, %94 : vector<128x256xf32>
    %96 = vector.broadcast %74 : vector<128x1xi32> to vector<128x256xi32>
    %97 = arith.cmpi eq, %75, %96 : vector<128x256xi32>
    %cst_22 = arith.constant 0.000000e+00 : f32
    %98 = vector.shape_cast %48 : vector<128x1xf32> to vector<128x1xf32>
    %99 = vector.broadcast %98 : vector<128x1xf32> to vector<128x256xf32>
    %100 = vector.broadcast %cst_22 : f32 to vector<128x256xf32>
    %101 = arith.select %97, %99, %100 : vector<128x256xi1>, vector<128x256xf32>
    %102 = arith.addf %95, %101 : vector<128x256xf32>
    %c0_23 = arith.constant 0 : index
    %c0_24 = arith.constant 0 : index
    %103 = vector.load %arg6[%c0_23, %c0_24] : memref<128x128xf32, #tpu.memory_space<vmem>>, vector<128x128xf32>
    %104 = arith.truncf %102 : vector<128x256xf32> to vector<128x256xbf16>
    %c0_25 = arith.constant 0 : index
    %c0_26 = arith.constant 0 : index
    %105 = vector.load %arg3[%c0_25, %c0_26] : memref<256x128xbf16, #tpu.memory_space<vmem>>, vector<256x128xbf16>
    %cst_27 = arith.constant dense<0.000000e+00> : vector<128x128xf32>
    %106 = tpu.matmul %104, %105, %cst_27 {dimension_numbers = #tpu.dot_dimension_numbers<[1], [0], [0], [1], [0, 0, 1, 1], [], []>} : vector<128x256xbf16>, vector<256x128xbf16>, vector<128x128xf32> -> vector<128x128xf32>
    %107 = arith.addf %103, %106 : vector<128x128xf32>
    %c0_28 = arith.constant 0 : index
    %c0_29 = arith.constant 0 : index
    %108 = vector.load %arg6[%c0_28, %c0_29] : memref<128x128xf32, #tpu.memory_space<vmem>>, vector<128x128xf32>
    tpu.vector_store %arg6[%c0_28, %c0_29], %107 {strides = array<i32>} : memref<128x128xf32, #tpu.memory_space<vmem>>, vector<128x128xf32>,
    %c1_i32 = arith.constant 1 : i32
    %109 = arith.cmpi eq, %arg1, %c1_i32 : i32
    %110 = arith.extui %109 : i1 to i32
    %c0_i32_30 = arith.constant 0 : i32
    %111 = arith.cmpi ne, %110, %c0_i32_30 : i32
    scf.if %111 {
      %c0_31 = arith.constant 0 : index
      %c0_32 = arith.constant 0 : index
      %112 = vector.load %arg6[%c0_31, %c0_32] : memref<128x128xf32, #tpu.memory_space<vmem>>, vector<128x128xf32>
      %113 = arith.truncf %112 : vector<128x128xf32> to vector<128x128xbf16>
      %c0_33 = arith.constant 0 : index
      %c0_34 = arith.constant 0 : index
      %114 = vector.load %arg4[%c0_33, %c0_34] : memref<128x128xbf16, #tpu.memory_space<vmem>>, vector<128x128xbf16>
      %cst_35 = arith.constant dense<0.000000e+00> : vector<128x128xf32>
      %115 = tpu.matmul %113, %114, %cst_35 {dimension_numbers = #tpu.dot_dimension_numbers<[1], [0], [0], [1], [0, 0, 1, 1], [], []>} : vector<128x128xbf16>, vector<128x128xbf16>, vector<128x128xf32> -> vector<128x128xf32>
      %c0_36 = arith.constant 0 : index
      %c0_37 = arith.constant 0 : index
      %116 = vector.load %arg5[%c0_36, %c0_37] : memref<1x128xf32, #tpu.memory_space<vmem>>, vector<1x128xf32>
      %117 = vector.broadcast %116 : vector<1x128xf32> to vector<128x128xf32>
      %118 = arith.addf %115, %117 : vector<128x128xf32>
      %cst_38 = arith.constant 0.000000e+00 : f32
      %119 = vector.broadcast %cst_38 : f32 to vector<128x128xf32>
      %120 = arith.maximumf %118, %119 : vector<128x128xf32>
      %c0_39 = arith.constant 0 : index
      %c0_40 = arith.constant 0 : index
      %121 = vector.load %arg7[%c0_39, %c0_40] : memref<128x128xf32, #tpu.memory_space<vmem>>, vector<128x128xf32>
      tpu.vector_store %arg7[%c0_39, %c0_40], %120 {strides = array<i32>} : memref<128x128xf32, #tpu.memory_space<vmem>>, vector<128x128xf32>,
    } else {
    }
    return
  }
  func.func @transform_0(%arg0: i32, %arg1: i32) -> (i32, i32) {
    %c0_i32 = arith.constant 0 : i32
    %c0_i32_0 = arith.constant 0 : i32
    return %arg0, %c0_i32 : i32, i32
  }
  func.func @transform_1(%arg0: i32, %arg1: i32) -> (i32, i32) {
    %c0_i32 = arith.constant 0 : i32
    %c0_i32_0 = arith.constant 0 : i32
    return %arg1, %c0_i32 : i32, i32
  }
  func.func @transform_2(%arg0: i32, %arg1: i32) -> (i32, i32) {
    %c0_i32 = arith.constant 0 : i32
    %c0_i32_0 = arith.constant 0 : i32
    %c0_i32_1 = arith.constant 0 : i32
    return %c0_i32, %c0_i32_0 : i32, i32
  }
  func.func @transform_3(%arg0: i32, %arg1: i32) -> (i32, i32) {
    %c0_i32 = arith.constant 0 : i32
    %c0_i32_0 = arith.constant 0 : i32
    %c0_i32_1 = arith.constant 0 : i32
    return %c0_i32, %c0_i32_0 : i32, i32
  }
  func.func @transform_4(%arg0: i32, %arg1: i32) -> (i32, i32) {
    %c0_i32 = arith.constant 0 : i32
    %c0_i32_0 = arith.constant 0 : i32
    return %arg0, %c0_i32 : i32, i32
  }
  func.func @transform_5(%arg0: i32, %arg1: i32) -> (i32, i32) {
    %c0_i32 = arith.constant 0 : i32
    %c0_i32_0 = arith.constant 0 : i32
    return %arg0, %c0_i32 : i32, i32
  }
}

</mosaic_0001>

<llo_original>
// kernel: tpu_custom_call.1
$region0: #{tpu_custom_call.1}
  #allocation0 [shape = 'u32[]', space=smem, size = 0x4, offset = 0x4, fixed_abs, tag = 'smem constant byte address 0x4 - core index']
  #allocation1 [shape = 'u32[144,128]{1,0:T(1,128)}', space=vmem, size = 0x12000, scoped, tag = 'internal scratch']
  %s0 = inlined_call_operand.vmem [shape: f32[128,4], index: 0, kind: input, shape index: {}]
  %s1 = inlined_call_operand.hbm [shape: bf16[512,128], index: 1, kind: input, shape index: {}]
  %s2 = inlined_call_operand.vmem [shape: bf16[128,128], index: 2, kind: input, shape index: {}]
  %s3 = inlined_call_operand.vmem [shape: f32[1,128], index: 3, kind: input, shape index: {}]
  %s4 = inlined_call_operand.hbm [shape: f32[128,128], index: 4, kind: output, shape index: {0}]
  %s5 = inlined_call_operand.hbm [shape: f32[128,128], index: 5, kind: output, shape index: {1}]
  %6 = xla_tuple %s4, %s5
  %s7 = sld [smem:[#allocation0]]
  $region69: #{tpu_custom_call.1} parent=0
    _
  %s9 = ssub.s32 1, %s7
  %s10 = scalar_select 0, %s9, %s7
  $region1: #{tpu_custom_call.1} parent=0
    #allocation2 [shape = 'u8[131072]{0}', space=vmem, size = 0x20000, scoped, tag = 'input window, operand 1']
    #allocation3 [shape = 's32[2]{0}', space=sflag, size = 0x8, scoped, tag = 'scoped memory for tpu_custom_call.1']
    #allocation4 [shape = 's32[2]{0}', space=sflag, size = 0x8, scoped, tag = 'scoped memory for tpu_custom_call.1']
    #allocation5 [shape = 'u8[65536]{0}', space=vmem, size = 0x10000, scoped, tag = 'output window, operand 0, single buffered']
    #allocation6 [shape = 'u8[65536]{0}', space=vmem, size = 0x10000, scoped, tag = 'output window, operand 1, single buffered']
    #allocation7 [shape = 's32[1]{0}', space=sflag, size = 0x4, scoped, tag = 'scoped memory for tpu_custom_call.1']
    %11 = vsyncpa [#allocation3], 0
    %s12 = scalar_lea.sflag [#allocation3], 1
    %13 = vsyncpa %s12, 0
    %14 = vsyncpa [#allocation4], 0
    %15 = vsyncpa [#allocation7], 0
    loop: start=0, step=1, limit=4
    $region2: #{tpu_custom_call.1} parent=1 // loop_pre_header
      _
    $region3: #{tpu_custom_call.1} parent=1 // loop_header
      %s17 = sphi 0, %s21
      %p18 = scmp.ge.s32.totalorder %s17, 4
      %s24 = sphi 0, %s36
      %s25 = sphi 0, %s32
      %s26 = sphi 0, %s24
      %s27 = sphi 0, %s25
      %s28 = sphi 0, %s26
      %s29 = sphi 0, %s27
      %s39 = sphi 0, %s41
      %s42 = sphi 0, %s39
      %s43 = sphi 0, %s42
      %s59 = sphi 0, %s43
      %s65 = sphi 0, %s67
      %s68 = sphi 0, %s65
      %s69 = sphi 0, %s68
      %s85 = sphi 0, %s69
      %s89 = sphi 0, %s89
      %s91 = sphi 0, %s89
      %s92 = sphi 0, %s91
      %s106 = sphi 0, %s92
      %s110 = sphi 0, %s110
      %s112 = sphi 0, %s110
      %s113 = sphi 0, %s112
      %s127 = sphi 0, %s113
      %s133 = sphi 0, %s135
      %s136 = sphi 0, %s133
      %s137 = sphi 0, %s136
      %s153 = sphi 0, %s137
      %s159 = sphi 0, %s161
      %s162 = sphi 0, %s159
      %s163 = sphi 0, %s162
      %s179 = sphi 0, %s163
    $region4: #{tpu_custom_call.1} parent=1 // loop_header_branch
      %20 = sbr.rel (%p18) target = $region8
    $region5: #{tpu_custom_call.1} parent=1 // loop_body
      %s22 = ssub.s32 %s17, 1
      %s23 = ssub.s32 %s17, 2
      %s30 = sadd.s32 1, %s25
      %p31 = scmp.ge.s32.totalorder %s30, 2
      %s32 = scalar_select %p31, 0, %s30
      %s33 = sadd.s32 1, %s24
      %s34 = scalar_select %p31, %s33, %s24
      %p35 = scmp.ge.s32.totalorder %s34, 1
      %s36 = scalar_select %p35, 0, %s34
      %s37 = ssub.s32 %s24, %s36
      %p38 = scmp.eq.s32.totalorder %s37, 0
      %s40 = sadd.s32 %s39, 1
      %s41 = scalar_select %p38, %s39, %s40
      %p44 = pneg %p38
      %p45 = scmp.eq.s32.totalorder %s17, 1
      %p46 = por %p44, %p45
      %p47 = scmp.ne.s32.totalorder %s39, %s42
      %p48 = scmp.eq.s32.totalorder %s17, 0
      %p49 = por %p47, %p48
      %p50 = scmp.ne.s32.totalorder %s39, %s42
      %p51 = scmp.eq.s32.totalorder %s22, 1
      %p52 = por %p50, %p51
      %p53 = scmp.ne.s32.totalorder %s42, %s43
      %p54 = scmp.eq.s32.totalorder %s22, 0
      %p55 = por %p53, %p54
      %p56 = scmp.ne.s32.totalorder %s42, %s43
      %p57 = scmp.eq.s32.totalorder %s23, 1
      %p58 = por %p56, %p57
      %p60 = scmp.ne.s32.totalorder %s43, %s59
      %p61 = scmp.eq.s32.totalorder %s23, 0
      %p62 = por %p60, %p61
      %s63 = ssub.s32 %s25, %s32
      %p64 = scmp.eq.s32.totalorder %s63, 0
      %s66 = sadd.s32 %s65, 1
      %s67 = scalar_select %p64, %s65, %s66
      %p70 = pneg %p64
      %p71 = scmp.eq.s32.totalorder %s17, 1
      %p72 = por %p70, %p71
      %p73 = scmp.ne.s32.totalorder %s65, %s68
      %p74 = scmp.eq.s32.totalorder %s17, 0
      %p75 = por %p73, %p74
      %p76 = scmp.ne.s32.totalorder %s65, %s68
      %p77 = scmp.eq.s32.totalorder %s22, 1
      %p78 = por %p76, %p77
      %p79 = scmp.ne.s32.totalorder %s68, %s69
      %p80 = scmp.eq.s32.totalorder %s22, 0
      %p81 = por %p79, %p80
      %p82 = scmp.ne.s32.totalorder %s68, %s69
      %p83 = scmp.eq.s32.totalorder %s23, 1
      %p84 = por %p82, %p83
      %p86 = scmp.ne.s32.totalorder %s69, %s85
      %p87 = scmp.eq.s32.totalorder %s23, 0
      %p88 = por %p86, %p87
      %s90 = sadd.s32 %s89, 1
      %p93 = scmp.eq.s32.totalorder %s17, 1
      %p94 = scmp.ne.s32.totalorder %s89, %s91
      %p95 = scmp.eq.s32.totalorder %s17, 0
      %p96 = por %p94, %p95
      %p97 = scmp.ne.s32.totalorder %s89, %s91
      %p98 = scmp.eq.s32.totalorder %s22, 1
      %p99 = por %p97, %p98
      %p100 = scmp.ne.s32.totalorder %s91, %s92
      %p101 = scmp.eq.s32.totalorder %s22, 0
      %p102 = por %p100, %p101
      %p103 = scmp.ne.s32.totalorder %s91, %s92
      %p104 = scmp.eq.s32.totalorder %s23, 1
      %p105 = por %p103, %p104
      %p107 = scmp.ne.s32.totalorder %s92, %s106
      %p108 = scmp.eq.s32.totalorder %s23, 0
      %p109 = por %p107, %p108
      %s111 = sadd.s32 %s110, 1
      %p114 = scmp.eq.s32.totalorder %s17, 1
      %p115 = scmp.ne.s32.totalorder %s110, %s112
      %p116 = scmp.eq.s32.totalorder %s17, 0
      %p117 = por %p115, %p116
      %p118 = scmp.ne.s32.totalorder %s110, %s112
      %p119 = scmp.eq.s32.totalorder %s22, 1
      %p120 = por %p118, %p119
      %p121 = scmp.ne.s32.totalorder %s112, %s113
      %p122 = scmp.eq.s32.totalorder %s22, 0
      %p123 = por %p121, %p122
      %p124 = scmp.ne.s32.totalorder %s112, %s113
      %p125 = scmp.eq.s32.totalorder %s23, 1
      %p126 = por %p124, %p125
      %p128 = scmp.ne.s32.totalorder %s113, %s127
      %p129 = scmp.eq.s32.totalorder %s23, 0
      %p130 = por %p128, %p129
      %s131 = ssub.s32 %s24, %s36
      %p132 = scmp.eq.s32.totalorder %s131, 0
      %s134 = sadd.s32 %s133, 1
      %s135 = scalar_select %p132, %s133, %s134
      %p138 = pneg %p132
      %p139 = scmp.eq.s32.totalorder %s17, 1
      %p140 = por %p138, %p139
      %p141 = scmp.ne.s32.totalorder %s133, %s136
      %p142 = scmp.eq.s32.totalorder %s17, 0
      %p143 = por %p141, %p142
      %p144 = scmp.ne.s32.totalorder %s133, %s136
      %p145 = scmp.eq.s32.totalorder %s22, 1
      %p146 = por %p144, %p145
      %p147 = scmp.ne.s32.totalorder %s136, %s137
      %p148 = scmp.eq.s32.totalorder %s22, 0
      %p149 = por %p147, %p148
      %p150 = scmp.ne.s32.totalorder %s136, %s137
      %p151 = scmp.eq.s32.totalorder %s23, 1
      %p152 = por %p150, %p151
      %p154 = scmp.ne.s32.totalorder %s137, %s153
      %p155 = scmp.eq.s32.totalorder %s23, 0
      %p156 = por %p154, %p155
      %s157 = ssub.s32 %s24, %s36
      %p158 = scmp.eq.s32.totalorder %s157, 0
      %s160 = sadd.s32 %s159, 1
      %s161 = scalar_select %p158, %s159, %s160
      %p164 = pneg %p158
      %p165 = scmp.eq.s32.totalorder %s17, 1
      %p166 = por %p164, %p165
      %p167 = scmp.ne.s32.totalorder %s159, %s162
      %p168 = scmp.eq.s32.totalorder %s17, 0
      %p169 = por %p167, %p168
      %p170 = scmp.ne.s32.totalorder %s159, %s162
      %p171 = scmp.eq.s32.totalorder %s22, 1
      %p172 = por %p170, %p171
      %p173 = scmp.ne.s32.totalorder %s162, %s163
      %p174 = scmp.eq.s32.totalorder %s22, 0
      %p175 = por %p173, %p174
      %p176 = scmp.ne.s32.totalorder %s162, %s163
      %p177 = scmp.eq.s32.totalorder %s23, 1
      %p178 = por %p176, %p177
      %p180 = scmp.ne.s32.totalorder %s163, %s179
      %p181 = scmp.eq.s32.totalorder %s23, 0
      %p182 = por %p180, %p181
      %p183 = scmp.le.s32.totalorder 1, %s17
      %p184 = scmp.lt.s32.totalorder %s17, 3
      %p185 = pnand %p183, %p184
      %p186 = pneg %p185
      // Predicated region
      $region9: #{tpu_custom_call.1} parent=5 // pred_check
        _
      $region10: #{tpu_custom_call.1} parent=5 // pred_check_branch
        %188 = sbr.rel (%p185) target = $region12
      $region11: #{tpu_custom_call.1} parent=5 // pred_region
        %s189 = ssub.s32 %s17, 1
        // Predicated region
        $region13: #{tpu_custom_call.1} parent=11 // pred_check
          %p190 = pneg %p55
        $region14: #{tpu_custom_call.1} parent=11 // pred_check_branch
          %192 = sbr.rel (%p190) target = $region16
        $region15: #{tpu_custom_call.1} parent=11 // pred_region
          %s193 = smul.u32 16, %s26
          %p194 = scmp.lt.s32.totalorder %s193, 15
          %s195 = scalar_select %p194, %s193, 15
          %s196 = smul.addr %s195, 8
          %s197 = scalar_lea.vmem %s0, %s196
          %s198 = smul.u32 16, %s26
        $region16: #{tpu_custom_call.1} parent=11 // pred_fallthru
          _
        // Predicated region
        $region17: #{tpu_custom_call.1} parent=11 // pred_check
          %p199 = pneg %p102
        $region18: #{tpu_custom_call.1} parent=11 // pred_check_branch
          %201 = sbr.rel (%p199) target = $region20
        $region19: #{tpu_custom_call.1} parent=11 // pred_region
          _
        $region20: #{tpu_custom_call.1} parent=11 // pred_fallthru
          _
        // Predicated region
        $region21: #{tpu_custom_call.1} parent=11 // pred_check
          %p202 = pneg %p123
        $region22: #{tpu_custom_call.1} parent=11 // pred_check_branch
          %204 = sbr.rel (%p202) target = $region24
        $region23: #{tpu_custom_call.1} parent=11 // pred_region
          _
        $region24: #{tpu_custom_call.1} parent=11 // pred_fallthru
          _
      $region12: #{tpu_custom_call.1} parent=5 // pred_fallthru
        _
      %p205 = scmp.lt.s32.totalorder %s17, 2
      // Predicated region
      $region25: #{tpu_custom_call.1} parent=5 // pred_check
        %p206 = pneg %p205
      $region26: #{tpu_custom_call.1} parent=5 // pred_check_branch
        %208 = sbr.rel (%p206) target = $region28
      $region27: #{tpu_custom_call.1} parent=5 // pred_region
        // Predicated region
        $region29: #{tpu_custom_call.1} parent=27 // pred_check
          %p209 = pneg %p75
        $region30: #{tpu_custom_call.1} parent=27 // pred_check_branch
          %211 = sbr.rel (%p209) target = $region32
        $region31: #{tpu_custom_call.1} parent=27 // pred_region
          %s212 = sand.u32 %s65, 1
          %s213 = scalar_lea.sflag [#allocation3], %s212
          %s214 = sand.u32 %s65, 1
          %s215 = smul.addr %s214, 128
          %s216 = scalar_lea.vmem [#allocation2], %s215
          %s217 = smul.u32 32, %s25
          %s219 = ssub.s32 2048, 2048
          %220 = vsyncadd %s213, %s219
          %s221 = smul.addr %s217, 64
          %s222 = scalar_lea.hbm %s1, %s221
          %s223 = sshll.u32 %s216, 4
          %s224 = int_to_ptr.vmem [resolvable:$true] %s223
          %229 = dma.hbm_to_vmem [thread:$0]  %s222, 2048, %s224, %s213, 64, 64, 4
        $region32: #{tpu_custom_call.1} parent=27 // pred_fallthru
          _
      $region28: #{tpu_custom_call.1} parent=5 // pred_fallthru
        _
      %p230 = scmp.le.s32.totalorder 1, %s17
      %p231 = scmp.lt.s32.totalorder %s17, 3
      %p232 = pnand %p230, %p231
      %p233 = pneg %p232
      // Predicated region
      $region33: #{tpu_custom_call.1} parent=5 // pred_check
        _
      $region34: #{tpu_custom_call.1} parent=5 // pred_check_branch
        %235 = sbr.rel (%p232) target = $region36
      $region35: #{tpu_custom_call.1} parent=5 // pred_region
        %s236 = ssub.s32 %s17, 1
        %s237 = sand.u32 %s68, 1
        %s238 = scalar_lea.sflag [#allocation3], %s237
        %s239 = sand.u32 %s68, 1
        %s240 = smul.addr %s239, 128
        %s241 = scalar_lea.vmem [#allocation2], %s240
        // Predicated region
        $region37: #{tpu_custom_call.1} parent=35 // pred_check
          %p242 = pneg %p81
        $region38: #{tpu_custom_call.1} parent=35 // pred_check_branch
          %244 = sbr.rel (%p242) target = $region40
        $region39: #{tpu_custom_call.1} parent=35 // pred_region
          %245 = dma.done %s238, 2048
        $region40: #{tpu_custom_call.1} parent=35 // pred_fallthru
          _
        %s246 = smul.u32 16, %s26
        %p247 = scmp.lt.s32.totalorder %s246, 15
        %s248 = scalar_select %p247, %s246, 15
        %s249 = smul.addr %s248, 8
        %s250 = scalar_lea.vmem %s0, %s249
        %p251 = pneg %p55
        %p252 = pneg %p52
        %s253 = sand.u32 %s68, 1
        %s254 = scalar_lea.sflag [#allocation3], %s253
        %s255 = sand.u32 %s68, 1
        %s256 = smul.addr %s255, 128
        %s257 = scalar_lea.vmem [#allocation2], %s256
        %p258 = pneg %p81
        %p259 = pneg %p78
        %p260 = pneg %p102
        %p261 = pneg %p99
        %p262 = pneg %p123
        %p263 = pneg %p120
        %p264 = pneg %p149
        %p265 = pneg %p146
        %p266 = pneg %p175
        %p267 = pneg %p172
        %s268 = smul.u32 16, %s26
        %p269 = scmp.lt.s32.totalorder %s268, 15
        %s270 = scalar_select %p269, %s268, 15
        %s271 = smul.addr %s270, 8
        %s272 = scalar_lea.vmem %s0, %s271
        %s273 = smul.u32 16, %s26
        %s274 = smul.u32 32, %s27
        %s275 = smul.u32 16, %s26
        %s276 = smul.u32 16, %s26
        %p278 = scmp.eq.s32.totalorder %s27, 0
        // Predicated region
        $region41: #{tpu_custom_call.1} parent=35 // pred_check
          %p279 = pneg %p278
        $region42: #{tpu_custom_call.1} parent=35 // pred_check_branch
          %281 = sbr.rel (%p279) target = $region44
        $region43: #{tpu_custom_call.1} parent=35 // pred_region
          %282 = vst [vmem:[#allocation5] sm:$0xff] 0.0
          %283 = vst [vmem:[#allocation5 + $0x8] sm:$0xff] 0.0
          %284 = vst [vmem:[#allocation5 + $0x10] sm:$0xff] 0.0
          %285 = vst [vmem:[#allocation5 + $0x18] sm:$0xff] 0.0
          %286 = vst [vmem:[#allocation5 + $0x20] sm:$0xff] 0.0
          %287 = vst [vmem:[#allocation5 + $0x28] sm:$0xff] 0.0
          %288 = vst [vmem:[#allocation5 + $0x30] sm:$0xff] 0.0
          %289 = vst [vmem:[#allocation5 + $0x38] sm:$0xff] 0.0
          %290 = vst [vmem:[#allocation5 + $0x40] sm:$0xff] 0.0
          %291 = vst [vmem:[#allocation5 + $0x48] sm:$0xff] 0.0
          %292 = vst [vmem:[#allocation5 + $0x50] sm:$0xff] 0.0
          %293 = vst [vmem:[#allocation5 + $0x58] sm:$0xff] 0.0
          %294 = vst [vmem:[#allocation5 + $0x60] sm:$0xff] 0.0
          %295 = vst [vmem:[#allocation5 + $0x68] sm:$0xff] 0.0
          %296 = vst [vmem:[#allocation5 + $0x70] sm:$0xff] 0.0
          %297 = vst [vmem:[#allocation5 + $0x78] sm:$0xff] 0.0
        $region44: #{tpu_custom_call.1} parent=35 // pred_fallthru
          _
        %v298 = vld [vmem:[%s272] sm:$0xff]
        %v299 = vld [vmem:[%s272 + $0x8] sm:$0xff]
        %v300 = vld [vmem:[%s272 + $0x10] sm:$0xff]
        %v301 = vld [vmem:[%s272 + $0x18] sm:$0xff]
        %v302 = vld [vmem:[%s272 + $0x20] sm:$0xff]
        %v303 = vld [vmem:[%s272 + $0x28] sm:$0xff]
        %v304 = vld [vmem:[%s272 + $0x30] sm:$0xff]
        %v305 = vld [vmem:[%s272 + $0x38] sm:$0xff]
        %v306 = vld [vmem:[%s272 + $0x40] sm:$0xff]
        %v307 = vld [vmem:[%s272 + $0x48] sm:$0xff]
        %v308 = vld [vmem:[%s272 + $0x50] sm:$0xff]
        %v309 = vld [vmem:[%s272 + $0x58] sm:$0xff]
        %v310 = vld [vmem:[%s272 + $0x60] sm:$0xff]
        %v311 = vld [vmem:[%s272 + $0x68] sm:$0xff]
        %v312 = vld [vmem:[%s272 + $0x70] sm:$0xff]
        %v313 = vld [vmem:[%s272 + $0x78] sm:$0xff]
        %v314 = vfloor.f32 %v298
        %v315 = vfloor.f32 %v299
        %v316 = vfloor.f32 %v300
        %v317 = vfloor.f32 %v301
        %v318 = vfloor.f32 %v302
        %v319 = vfloor.f32 %v303
        %v320 = vfloor.f32 %v304
        %v321 = vfloor.f32 %v305
        %v322 = vfloor.f32 %v306
        %v323 = vfloor.f32 %v307
        %v324 = vfloor.f32 %v308
        %v325 = vfloor.f32 %v309
        %v326 = vfloor.f32 %v310
        %v327 = vfloor.f32 %v311
        %v328 = vfloor.f32 %v312
        %v329 = vfloor.f32 %v313
        %v330 = vadd.f32 %v314, 1.0
        %v331 = vadd.f32 %v315, 1.0
        %v332 = vadd.f32 %v316, 1.0
        %v333 = vadd.f32 %v317, 1.0
        %v334 = vadd.f32 %v318, 1.0
        %v335 = vadd.f32 %v319, 1.0
        %v336 = vadd.f32 %v320, 1.0
        %v337 = vadd.f32 %v321, 1.0
        %v338 = vadd.f32 %v322, 1.0
        %v339 = vadd.f32 %v323, 1.0
        %v340 = vadd.f32 %v324, 1.0
        %v341 = vadd.f32 %v325, 1.0
        %v342 = vadd.f32 %v326, 1.0
        %v343 = vadd.f32 %v327, 1.0
        %v344 = vadd.f32 %v328, 1.0
        %v345 = vadd.f32 %v329, 1.0
        %v346 = vmax.f32 %v314, 0.0
        %v347 = vmax.f32 %v315, 0.0
        %v348 = vmax.f32 %v316, 0.0
        %v349 = vmax.f32 %v317, 0.0
        %v350 = vmax.f32 %v318, 0.0
        %v351 = vmax.f32 %v319, 0.0
        %v352 = vmax.f32 %v320, 0.0
        %v353 = vmax.f32 %v321, 0.0
        %v354 = vmax.f32 %v322, 0.0
        %v355 = vmax.f32 %v323, 0.0
        %v356 = vmax.f32 %v324, 0.0
        %v357 = vmax.f32 %v325, 0.0
        %v358 = vmax.f32 %v326, 0.0
        %v359 = vmax.f32 %v327, 0.0
        %v360 = vmax.f32 %v328, 0.0
        %v361 = vmax.f32 %v329, 0.0
        %v362 = vmin.f32 %v346, 15.0
        %v363 = vmin.f32 %v347, 15.0
        %v364 = vmin.f32 %v348, 15.0
        %v365 = vmin.f32 %v349, 15.0
        %v366 = vmin.f32 %v350, 15.0
        %v367 = vmin.f32 %v351, 15.0
        %v368 = vmin.f32 %v352, 15.0
        %v369 = vmin.f32 %v353, 15.0
        %v370 = vmin.f32 %v354, 15.0
        %v371 = vmin.f32 %v355, 15.0
        %v372 = vmin.f32 %v356, 15.0
        %v373 = vmin.f32 %v357, 15.0
        %v374 = vmin.f32 %v358, 15.0
        %v375 = vmin.f32 %v359, 15.0
        %v376 = vmin.f32 %v360, 15.0
        %v377 = vmin.f32 %v361, 15.0
        %v378 = vmax.f32 %v330, 0.0
        %v379 = vmax.f32 %v331, 0.0
        %v380 = vmax.f32 %v332, 0.0
        %v381 = vmax.f32 %v333, 0.0
        %v382 = vmax.f32 %v334, 0.0
        %v383 = vmax.f32 %v335, 0.0
        %v384 = vmax.f32 %v336, 0.0
        %v385 = vmax.f32 %v337, 0.0
        %v386 = vmax.f32 %v338, 0.0
        %v387 = vmax.f32 %v339, 0.0
        %v388 = vmax.f32 %v340, 0.0
        %v389 = vmax.f32 %v341, 0.0
        %v390 = vmax.f32 %v342, 0.0
        %v391 = vmax.f32 %v343, 0.0
        %v392 = vmax.f32 %v344, 0.0
        %v393 = vmax.f32 %v345, 0.0
        %v394 = vmin.f32 %v378, 15.0
        %v395 = vmin.f32 %v379, 15.0
        %v396 = vmin.f32 %v380, 15.0
        %v397 = vmin.f32 %v381, 15.0
        %v398 = vmin.f32 %v382, 15.0
        %v399 = vmin.f32 %v383, 15.0
        %v400 = vmin.f32 %v384, 15.0
        %v401 = vmin.f32 %v385, 15.0
        %v402 = vmin.f32 %v386, 15.0
        %v403 = vmin.f32 %v387, 15.0
        %v404 = vmin.f32 %v388, 15.0
        %v405 = vmin.f32 %v389, 15.0
        %v406 = vmin.f32 %v390, 15.0
        %v407 = vmin.f32 %v391, 15.0
        %v408 = vmin.f32 %v392, 15.0
        %v409 = vmin.f32 %v393, 15.0
        %v410 = vsub.f32 %v394, %v298
        %v411 = vsub.f32 %v395, %v299
        %v412 = vsub.f32 %v396, %v300
        %v413 = vsub.f32 %v397, %v301
        %v414 = vsub.f32 %v398, %v302
        %v415 = vsub.f32 %v399, %v303
        %v416 = vsub.f32 %v400, %v304
        %v417 = vsub.f32 %v401, %v305
        %v418 = vsub.f32 %v402, %v306
        %v419 = vsub.f32 %v403, %v307
        %v420 = vsub.f32 %v404, %v308
        %v421 = vsub.f32 %v405, %v309
        %v422 = vsub.f32 %v406, %v310
        %v423 = vsub.f32 %v407, %v311
        %v424 = vsub.f32 %v408, %v312
        %v425 = vsub.f32 %v409, %v313
        %442 = vrot.lane.b32.xlu0 %v410, 127
        %v443 = vpop.permute.xlu0 %442
        %444 = vrot.lane.b32.xlu0 %v411, 127
        %v445 = vpop.permute.xlu0 %444
        %446 = vrot.lane.b32.xlu0 %v412, 127
        %v447 = vpop.permute.xlu0 %446
        %448 = vrot.lane.b32.xlu0 %v413, 127
        %v449 = vpop.permute.xlu0 %448
        %450 = vrot.lane.b32.xlu0 %v414, 127
        %v451 = vpop.permute.xlu0 %450
        %452 = vrot.lane.b32.xlu0 %v415, 127
        %v453 = vpop.permute.xlu0 %452
        %454 = vrot.lane.b32.xlu0 %v416, 127
        %v455 = vpop.permute.xlu0 %454
        %456 = vrot.lane.b32.xlu0 %v417, 127
        %v457 = vpop.permute.xlu0 %456
        %458 = vrot.lane.b32.xlu0 %v418, 127
        %v459 = vpop.permute.xlu0 %458
        %460 = vrot.lane.b32.xlu0 %v419, 127
        %v461 = vpop.permute.xlu0 %460
        %462 = vrot.lane.b32.xlu0 %v420, 127
        %v463 = vpop.permute.xlu0 %462
        %464 = vrot.lane.b32.xlu0 %v421, 127
        %v465 = vpop.permute.xlu0 %464
        %466 = vrot.lane.b32.xlu0 %v422, 127
        %v467 = vpop.permute.xlu0 %466
        %468 = vrot.lane.b32.xlu0 %v423, 127
        %v469 = vpop.permute.xlu0 %468
        %470 = vrot.lane.b32.xlu0 %v424, 127
        %v471 = vpop.permute.xlu0 %470
        %472 = vrot.lane.b32.xlu0 %v425, 127
        %v473 = vpop.permute.xlu0 %472
        %v490 = vmul.f32 %v410, %v443
        %v491 = vmul.f32 %v411, %v445
        %v492 = vmul.f32 %v412, %v447
        %v493 = vmul.f32 %v413, %v449
        %v494 = vmul.f32 %v414, %v451
        %v495 = vmul.f32 %v415, %v453
        %v496 = vmul.f32 %v416, %v455
        %v497 = vmul.f32 %v417, %v457
        %v498 = vmul.f32 %v418, %v459
        %v499 = vmul.f32 %v419, %v461
        %v500 = vmul.f32 %v420, %v463
        %v501 = vmul.f32 %v421, %v465
        %v502 = vmul.f32 %v422, %v467
        %v503 = vmul.f32 %v423, %v469
        %v504 = vmul.f32 %v424, %v471
        %v505 = vmul.f32 %v425, %v473
        %v506 = vsub.f32 %v298, %v362
        %v507 = vsub.f32 %v299, %v363
        %v508 = vsub.f32 %v300, %v364
        %v509 = vsub.f32 %v301, %v365
        %v510 = vsub.f32 %v302, %v366
        %v511 = vsub.f32 %v303, %v367
        %v512 = vsub.f32 %v304, %v368
        %v513 = vsub.f32 %v305, %v369
        %v514 = vsub.f32 %v306, %v370
        %v515 = vsub.f32 %v307, %v371
        %v516 = vsub.f32 %v308, %v372
        %v517 = vsub.f32 %v309, %v373
        %v518 = vsub.f32 %v310, %v374
        %v519 = vsub.f32 %v311, %v375
        %v520 = vsub.f32 %v312, %v376
        %v521 = vsub.f32 %v313, %v377
        %538 = vrot.lane.b32.xlu0 %v506, 127
        %v539 = vpop.permute.xlu0 %538
        %540 = vrot.lane.b32.xlu0 %v507, 127
        %v541 = vpop.permute.xlu0 %540
        %542 = vrot.lane.b32.xlu0 %v508, 127
        %v543 = vpop.permute.xlu0 %542
        %544 = vrot.lane.b32.xlu0 %v509, 127
        %v545 = vpop.permute.xlu0 %544
        %546 = vrot.lane.b32.xlu0 %v510, 127
        %v547 = vpop.permute.xlu0 %546
        %548 = vrot.lane.b32.xlu0 %v511, 127
        %v549 = vpop.permute.xlu0 %548
        %550 = vrot.lane.b32.xlu0 %v512, 127
        %v551 = vpop.permute.xlu0 %550
        %552 = vrot.lane.b32.xlu0 %v513, 127
        %v553 = vpop.permute.xlu0 %552
        %554 = vrot.lane.b32.xlu0 %v514, 127
        %v555 = vpop.permute.xlu0 %554
        %556 = vrot.lane.b32.xlu0 %v515, 127
        %v557 = vpop.permute.xlu0 %556
        %558 = vrot.lane.b32.xlu0 %v516, 127
        %v559 = vpop.permute.xlu0 %558
        %560 = vrot.lane.b32.xlu0 %v517, 127
        %v561 = vpop.permute.xlu0 %560
        %562 = vrot.lane.b32.xlu0 %v518, 127
        %v563 = vpop.permute.xlu0 %562
        %564 = vrot.lane.b32.xlu0 %v519, 127
        %v565 = vpop.permute.xlu0 %564
        %566 = vrot.lane.b32.xlu0 %v520, 127
        %v567 = vpop.permute.xlu0 %566
        %568 = vrot.lane.b32.xlu0 %v521, 127
        %v569 = vpop.permute.xlu0 %568
        %v586 = vmul.f32 %v410, %v539
        %v587 = vmul.f32 %v411, %v541
        %v588 = vmul.f32 %v412, %v543
        %v589 = vmul.f32 %v413, %v545
        %v590 = vmul.f32 %v414, %v547
        %v591 = vmul.f32 %v415, %v549
        %v592 = vmul.f32 %v416, %v551
        %v593 = vmul.f32 %v417, %v553
        %v594 = vmul.f32 %v418, %v555
        %v595 = vmul.f32 %v419, %v557
        %v596 = vmul.f32 %v420, %v559
        %v597 = vmul.f32 %v421, %v561
        %v598 = vmul.f32 %v422, %v563
        %v599 = vmul.f32 %v423, %v565
        %v600 = vmul.f32 %v424, %v567
        %v601 = vmul.f32 %v425, %v569
        %v602 = vmul.f32 %v506, %v443
        %v603 = vmul.f32 %v507, %v445
        %v604 = vmul.f32 %v508, %v447
        %v605 = vmul.f32 %v509, %v449
        %v606 = vmul.f32 %v510, %v451
        %v607 = vmul.f32 %v511, %v453
        %v608 = vmul.f32 %v512, %v455
        %v609 = vmul.f32 %v513, %v457
        %v610 = vmul.f32 %v514, %v459
        %v611 = vmul.f32 %v515, %v461
        %v612 = vmul.f32 %v516, %v463
        %v613 = vmul.f32 %v517, %v465
        %v614 = vmul.f32 %v518, %v467
        %v615 = vmul.f32 %v519, %v469
        %v616 = vmul.f32 %v520, %v471
        %v617 = vmul.f32 %v521, %v473
        %v618 = vmul.f32 %v506, %v539
        %v619 = vmul.f32 %v507, %v541
        %v620 = vmul.f32 %v508, %v543
        %v621 = vmul.f32 %v509, %v545
        %v622 = vmul.f32 %v510, %v547
        %v623 = vmul.f32 %v511, %v549
        %v624 = vmul.f32 %v512, %v551
        %v625 = vmul.f32 %v513, %v553
        %v626 = vmul.f32 %v514, %v555
        %v627 = vmul.f32 %v515, %v557
        %v628 = vmul.f32 %v516, %v559
        %v629 = vmul.f32 %v517, %v561
        %v630 = vmul.f32 %v518, %v563
        %v631 = vmul.f32 %v519, %v565
        %v632 = vmul.f32 %v520, %v567
        %v633 = vmul.f32 %v521, %v569
        %v634 = vcvt.f32.s32.to.zero.pseudo %v298
        %v635 = vcvt.f32.s32.to.zero.pseudo %v299
        %v636 = vcvt.f32.s32.to.zero.pseudo %v300
        %v637 = vcvt.f32.s32.to.zero.pseudo %v301
        %v638 = vcvt.f32.s32.to.zero.pseudo %v302
        %v639 = vcvt.f32.s32.to.zero.pseudo %v303
        %v640 = vcvt.f32.s32.to.zero.pseudo %v304
        %v641 = vcvt.f32.s32.to.zero.pseudo %v305
        %v642 = vcvt.f32.s32.to.zero.pseudo %v306
        %v643 = vcvt.f32.s32.to.zero.pseudo %v307
        %v644 = vcvt.f32.s32.to.zero.pseudo %v308
        %v645 = vcvt.f32.s32.to.zero.pseudo %v309
        %v646 = vcvt.f32.s32.to.zero.pseudo %v310
        %v647 = vcvt.f32.s32.to.zero.pseudo %v311
        %v648 = vcvt.f32.s32.to.zero.pseudo %v312
        %v649 = vcvt.f32.s32.to.zero.pseudo %v313
        %v650 = vcvt.f32.s32.to.zero.pseudo %v362
        %v651 = vcvt.f32.s32.to.zero.pseudo %v363
        %v652 = vcvt.f32.s32.to.zero.pseudo %v364
        %v653 = vcvt.f32.s32.to.zero.pseudo %v365
        %v654 = vcvt.f32.s32.to.zero.pseudo %v366
        %v655 = vcvt.f32.s32.to.zero.pseudo %v367
        %v656 = vcvt.f32.s32.to.zero.pseudo %v368
        %v657 = vcvt.f32.s32.to.zero.pseudo %v369
        %v658 = vcvt.f32.s32.to.zero.pseudo %v370
        %v659 = vcvt.f32.s32.to.zero.pseudo %v371
        %v660 = vcvt.f32.s32.to.zero.pseudo %v372
        %v661 = vcvt.f32.s32.to.zero.pseudo %v373
        %v662 = vcvt.f32.s32.to.zero.pseudo %v374
        %v663 = vcvt.f32.s32.to.zero.pseudo %v375
        %v664 = vcvt.f32.s32.to.zero.pseudo %v376
        %v665 = vcvt.f32.s32.to.zero.pseudo %v377
        %v666 = vcvt.f32.s32.to.zero.pseudo %v394
        %v667 = vcvt.f32.s32.to.zero.pseudo %v395
        %v668 = vcvt.f32.s32.to.zero.pseudo %v396
        %v669 = vcvt.f32.s32.to.zero.pseudo %v397
        %v670 = vcvt.f32.s32.to.zero.pseudo %v398
        %v671 = vcvt.f32.s32.to.zero.pseudo %v399
        %v672 = vcvt.f32.s32.to.zero.pseudo %v400
        %v673 = vcvt.f32.s32.to.zero.pseudo %v401
        %v674 = vcvt.f32.s32.to.zero.pseudo %v402
        %v675 = vcvt.f32.s32.to.zero.pseudo %v403
        %v676 = vcvt.f32.s32.to.zero.pseudo %v404
        %v677 = vcvt.f32.s32.to.zero.pseudo %v405
        %v678 = vcvt.f32.s32.to.zero.pseudo %v406
        %v679 = vcvt.f32.s32.to.zero.pseudo %v407
        %v680 = vcvt.f32.s32.to.zero.pseudo %v408
        %v681 = vcvt.f32.s32.to.zero.pseudo %v409
        %v682 = vmul.u32 %v634, 256
        %v683 = vmul.u32 %v635, 256
        %v684 = vmul.u32 %v636, 256
        %v685 = vmul.u32 %v637, 256
        %v686 = vmul.u32 %v638, 256
        %v687 = vmul.u32 %v639, 256
        %v688 = vmul.u32 %v640, 256
        %v689 = vmul.u32 %v641, 256
        %v690 = vmul.u32 %v642, 256
        %v691 = vmul.u32 %v643, 256
        %v692 = vmul.u32 %v644, 256
        %v693 = vmul.u32 %v645, 256
        %v694 = vmul.u32 %v646, 256
        %v695 = vmul.u32 %v647, 256
        %v696 = vmul.u32 %v648, 256
        %v697 = vmul.u32 %v649, 256
        %s698 = smul.u32 %s27, 256
        %v699 = vstv %s698
        %v700 = vsub.s32 %v682, %v699
        %v701 = vsub.s32 %v683, %v699
        %v702 = vsub.s32 %v684, %v699
        %v703 = vsub.s32 %v685, %v699
        %v704 = vsub.s32 %v686, %v699
        %v705 = vsub.s32 %v687, %v699
        %v706 = vsub.s32 %v688, %v699
        %v707 = vsub.s32 %v689, %v699
        %v708 = vsub.s32 %v690, %v699
        %v709 = vsub.s32 %v691, %v699
        %v710 = vsub.s32 %v692, %v699
        %v711 = vsub.s32 %v693, %v699
        %v712 = vsub.s32 %v694, %v699
        %v713 = vsub.s32 %v695, %v699
        %v714 = vsub.s32 %v696, %v699
        %v715 = vsub.s32 %v697, %v699
        %v716 = vmul.u32 %v650, 16
        %v717 = vmul.u32 %v651, 16
        %v718 = vmul.u32 %v652, 16
        %v719 = vmul.u32 %v653, 16
        %v720 = vmul.u32 %v654, 16
        %v721 = vmul.u32 %v655, 16
        %v722 = vmul.u32 %v656, 16
        %v723 = vmul.u32 %v657, 16
        %v724 = vmul.u32 %v658, 16
        %v725 = vmul.u32 %v659, 16
        %v726 = vmul.u32 %v660, 16
        %v727 = vmul.u32 %v661, 16
        %v728 = vmul.u32 %v662, 16
        %v729 = vmul.u32 %v663, 16
        %v730 = vmul.u32 %v664, 16
        %v731 = vmul.u32 %v665, 16
        %732 = vrot.lane.b32.xlu0 %v716, 126
        %v733 = vpop.permute.xlu0 %732
        %734 = vrot.lane.b32.xlu0 %v717, 126
        %v735 = vpop.permute.xlu0 %734
        %736 = vrot.lane.b32.xlu0 %v718, 126
        %v737 = vpop.permute.xlu0 %736
        %738 = vrot.lane.b32.xlu0 %v719, 126
        %v739 = vpop.permute.xlu0 %738
        %740 = vrot.lane.b32.xlu0 %v720, 126
        %v741 = vpop.permute.xlu0 %740
        %742 = vrot.lane.b32.xlu0 %v721, 126
        %v743 = vpop.permute.xlu0 %742
        %744 = vrot.lane.b32.xlu0 %v722, 126
        %v745 = vpop.permute.xlu0 %744
        %746 = vrot.lane.b32.xlu0 %v723, 126
        %v747 = vpop.permute.xlu0 %746
        %748 = vrot.lane.b32.xlu0 %v724, 126
        %v749 = vpop.permute.xlu0 %748
        %750 = vrot.lane.b32.xlu0 %v725, 126
        %v751 = vpop.permute.xlu0 %750
        %752 = vrot.lane.b32.xlu0 %v726, 126
        %v753 = vpop.permute.xlu0 %752
        %754 = vrot.lane.b32.xlu0 %v727, 126
        %v755 = vpop.permute.xlu0 %754
        %756 = vrot.lane.b32.xlu0 %v728, 126
        %v757 = vpop.permute.xlu0 %756
        %758 = vrot.lane.b32.xlu0 %v729, 126
        %v759 = vpop.permute.xlu0 %758
        %760 = vrot.lane.b32.xlu0 %v730, 126
        %v761 = vpop.permute.xlu0 %760
        %762 = vrot.lane.b32.xlu0 %v731, 126
        %v763 = vpop.permute.xlu0 %762
        %v764 = vadd.s32 %v700, %v733
        %v765 = vadd.s32 %v701, %v735
        %v766 = vadd.s32 %v702, %v737
        %v767 = vadd.s32 %v703, %v739
        %v768 = vadd.s32 %v704, %v741
        %v769 = vadd.s32 %v705, %v743
        %v770 = vadd.s32 %v706, %v745
        %v771 = vadd.s32 %v707, %v747
        %v772 = vadd.s32 %v708, %v749
        %v773 = vadd.s32 %v709, %v751
        %v774 = vadd.s32 %v710, %v753
        %v775 = vadd.s32 %v711, %v755
        %v776 = vadd.s32 %v712, %v757
        %v777 = vadd.s32 %v713, %v759
        %v778 = vadd.s32 %v714, %v761
        %v779 = vadd.s32 %v715, %v763
        %780 = vrot.lane.b32.xlu0 %v650, 127
        %v781 = vpop.permute.xlu0 %780
        %782 = vrot.lane.b32.xlu0 %v651, 127
        %v783 = vpop.permute.xlu0 %782
        %784 = vrot.lane.b32.xlu0 %v652, 127
        %v785 = vpop.permute.xlu0 %784
        %786 = vrot.lane.b32.xlu0 %v653, 127
        %v787 = vpop.permute.xlu0 %786
        %788 = vrot.lane.b32.xlu0 %v654, 127
        %v789 = vpop.permute.xlu0 %788
        %790 = vrot.lane.b32.xlu0 %v655, 127
        %v791 = vpop.permute.xlu0 %790
        %792 = vrot.lane.b32.xlu0 %v656, 127
        %v793 = vpop.permute.xlu0 %792
        %794 = vrot.lane.b32.xlu0 %v657, 127
        %v795 = vpop.permute.xlu0 %794
        %796 = vrot.lane.b32.xlu0 %v658, 127
        %v797 = vpop.permute.xlu0 %796
        %798 = vrot.lane.b32.xlu0 %v659, 127
        %v799 = vpop.permute.xlu0 %798
        %800 = vrot.lane.b32.xlu0 %v660, 127
        %v801 = vpop.permute.xlu0 %800
        %802 = vrot.lane.b32.xlu0 %v661, 127
        %v803 = vpop.permute.xlu0 %802
        %804 = vrot.lane.b32.xlu0 %v662, 127
        %v805 = vpop.permute.xlu0 %804
        %806 = vrot.lane.b32.xlu0 %v663, 127
        %v807 = vpop.permute.xlu0 %806
        %808 = vrot.lane.b32.xlu0 %v664, 127
        %v809 = vpop.permute.xlu0 %808
        %810 = vrot.lane.b32.xlu0 %v665, 127
        %v811 = vpop.permute.xlu0 %810
        %v812 = vadd.s32 %v764, %v781
        %v813 = vadd.s32 %v765, %v783
        %v814 = vadd.s32 %v766, %v785
        %v815 = vadd.s32 %v767, %v787
        %v816 = vadd.s32 %v768, %v789
        %v817 = vadd.s32 %v769, %v791
        %v818 = vadd.s32 %v770, %v793
        %v819 = vadd.s32 %v771, %v795
        %v820 = vadd.s32 %v772, %v797
        %v821 = vadd.s32 %v773, %v799
        %v822 = vadd.s32 %v774, %v801
        %v823 = vadd.s32 %v775, %v803
        %v824 = vadd.s32 %v776, %v805
        %v825 = vadd.s32 %v777, %v807
        %v826 = vadd.s32 %v778, %v809
        %v827 = vadd.s32 %v779, %v811
        %v828 = vmul.u32 %v666, 16
        %v829 = vmul.u32 %v667, 16
        %v830 = vmul.u32 %v668, 16
        %v831 = vmul.u32 %v669, 16
        %v832 = vmul.u32 %v670, 16
        %v833 = vmul.u32 %v671, 16
        %v834 = vmul.u32 %v672, 16
        %v835 = vmul.u32 %v673, 16
        %v836 = vmul.u32 %v674, 16
        %v837 = vmul.u32 %v675, 16
        %v838 = vmul.u32 %v676, 16
        %v839 = vmul.u32 %v677, 16
        %v840 = vmul.u32 %v678, 16
        %v841 = vmul.u32 %v679, 16
        %v842 = vmul.u32 %v680, 16
        %v843 = vmul.u32 %v681, 16
        %844 = vrot.lane.b32.xlu0 %v828, 126
        %v845 = vpop.permute.xlu0 %844
        %846 = vrot.lane.b32.xlu0 %v829, 126
        %v847 = vpop.permute.xlu0 %846
        %848 = vrot.lane.b32.xlu0 %v830, 126
        %v849 = vpop.permute.xlu0 %848
        %850 = vrot.lane.b32.xlu0 %v831, 126
        %v851 = vpop.permute.xlu0 %850
        %852 = vrot.lane.b32.xlu0 %v832, 126
        %v853 = vpop.permute.xlu0 %852
        %854 = vrot.lane.b32.xlu0 %v833, 126
        %v855 = vpop.permute.xlu0 %854
        %856 = vrot.lane.b32.xlu0 %v834, 126
        %v857 = vpop.permute.xlu0 %856
        %858 = vrot.lane.b32.xlu0 %v835, 126
        %v859 = vpop.permute.xlu0 %858
        %860 = vrot.lane.b32.xlu0 %v836, 126
        %v861 = vpop.permute.xlu0 %860
        %862 = vrot.lane.b32.xlu0 %v837, 126
        %v863 = vpop.permute.xlu0 %862
        %864 = vrot.lane.b32.xlu0 %v838, 126
        %v865 = vpop.permute.xlu0 %864
        %866 = vrot.lane.b32.xlu0 %v839, 126
        %v867 = vpop.permute.xlu0 %866
        %868 = vrot.lane.b32.xlu0 %v840, 126
        %v869 = vpop.permute.xlu0 %868
        %870 = vrot.lane.b32.xlu0 %v841, 126
        %v871 = vpop.permute.xlu0 %870
        %872 = vrot.lane.b32.xlu0 %v842, 126
        %v873 = vpop.permute.xlu0 %872
        %874 = vrot.lane.b32.xlu0 %v843, 126
        %v875 = vpop.permute.xlu0 %874
        %v876 = vadd.s32 %v700, %v845
        %v877 = vadd.s32 %v701, %v847
        %v878 = vadd.s32 %v702, %v849
        %v879 = vadd.s32 %v703, %v851
        %v880 = vadd.s32 %v704, %v853
        %v881 = vadd.s32 %v705, %v855
        %v882 = vadd.s32 %v706, %v857
        %v883 = vadd.s32 %v707, %v859
        %v884 = vadd.s32 %v708, %v861
        %v885 = vadd.s32 %v709, %v863
        %v886 = vadd.s32 %v710, %v865
        %v887 = vadd.s32 %v711, %v867
        %v888 = vadd.s32 %v712, %v869
        %v889 = vadd.s32 %v713, %v871
        %v890 = vadd.s32 %v714, %v873
        %v891 = vadd.s32 %v715, %v875
        %v892 = vadd.s32 %v876, %v781
        %v893 = vadd.s32 %v877, %v783
        %v894 = vadd.s32 %v878, %v785
        %v895 = vadd.s32 %v879, %v787
        %v896 = vadd.s32 %v880, %v789
        %v897 = vadd.s32 %v881, %v791
        %v898 = vadd.s32 %v882, %v793
        %v899 = vadd.s32 %v883, %v795
        %v900 = vadd.s32 %v884, %v797
        %v901 = vadd.s32 %v885, %v799
        %v902 = vadd.s32 %v886, %v801
        %v903 = vadd.s32 %v887, %v803
        %v904 = vadd.s32 %v888, %v805
        %v905 = vadd.s32 %v889, %v807
        %v906 = vadd.s32 %v890, %v809
        %v907 = vadd.s32 %v891, %v811
        %908 = vrot.lane.b32.xlu0 %v666, 127
        %v909 = vpop.permute.xlu0 %908
        %910 = vrot.lane.b32.xlu0 %v667, 127
        %v911 = vpop.permute.xlu0 %910
        %912 = vrot.lane.b32.xlu0 %v668, 127
        %v913 = vpop.permute.xlu0 %912
        %914 = vrot.lane.b32.xlu0 %v669, 127
        %v915 = vpop.permute.xlu0 %914
        %916 = vrot.lane.b32.xlu0 %v670, 127
        %v917 = vpop.permute.xlu0 %916
        %918 = vrot.lane.b32.xlu0 %v671, 127
        %v919 = vpop.permute.xlu0 %918
        %920 = vrot.lane.b32.xlu0 %v672, 127
        %v921 = vpop.permute.xlu0 %920
        %922 = vrot.lane.b32.xlu0 %v673, 127
        %v923 = vpop.permute.xlu0 %922
        %924 = vrot.lane.b32.xlu0 %v674, 127
        %v925 = vpop.permute.xlu0 %924
        %926 = vrot.lane.b32.xlu0 %v675, 127
        %v927 = vpop.permute.xlu0 %926
        %928 = vrot.lane.b32.xlu0 %v676, 127
        %v929 = vpop.permute.xlu0 %928
        %930 = vrot.lane.b32.xlu0 %v677, 127
        %v931 = vpop.permute.xlu0 %930
        %932 = vrot.lane.b32.xlu0 %v678, 127
        %v933 = vpop.permute.xlu0 %932
        %934 = vrot.lane.b32.xlu0 %v679, 127
        %v935 = vpop.permute.xlu0 %934
        %936 = vrot.lane.b32.xlu0 %v680, 127
        %v937 = vpop.permute.xlu0 %936
        %938 = vrot.lane.b32.xlu0 %v681, 127
        %v939 = vpop.permute.xlu0 %938
        %v940 = vadd.s32 %v764, %v909
        %v941 = vadd.s32 %v765, %v911
        %v942 = vadd.s32 %v766, %v913
        %v943 = vadd.s32 %v767, %v915
        %v944 = vadd.s32 %v768, %v917
        %v945 = vadd.s32 %v769, %v919
        %v946 = vadd.s32 %v770, %v921
        %v947 = vadd.s32 %v771, %v923
        %v948 = vadd.s32 %v772, %v925
        %v949 = vadd.s32 %v773, %v927
        %v950 = vadd.s32 %v774, %v929
        %v951 = vadd.s32 %v775, %v931
        %v952 = vadd.s32 %v776, %v933
        %v953 = vadd.s32 %v777, %v935
        %v954 = vadd.s32 %v778, %v937
        %v955 = vadd.s32 %v779, %v939
        %v956 = vadd.s32 %v876, %v909
        %v957 = vadd.s32 %v877, %v911
        %v958 = vadd.s32 %v878, %v913
        %v959 = vadd.s32 %v879, %v915
        %v960 = vadd.s32 %v880, %v917
        %v961 = vadd.s32 %v881, %v919
        %v962 = vadd.s32 %v882, %v921
        %v963 = vadd.s32 %v883, %v923
        %v964 = vadd.s32 %v884, %v925
        %v965 = vadd.s32 %v885, %v927
        %v966 = vadd.s32 %v886, %v929
        %v967 = vadd.s32 %v887, %v931
        %v968 = vadd.s32 %v888, %v933
        %v969 = vadd.s32 %v889, %v935
        %v970 = vadd.s32 %v890, %v937
        %v971 = vadd.s32 %v891, %v939
        %v972 = vlaneseq
        %v973 = vand.u32 %v972, 127
        %v974 = vadd.s32 %v973, 128
        %975 = vset.pattern.permute.xlu0 0
        %976 = vperm.xlu0 %975, %v812
        %v977 = vpop.permute.xlu0 %976
        %978 = vset.pattern.permute.xlu0 0
        %979 = vperm.xlu0 %978, %v813
        %v980 = vpop.permute.xlu0 %979
        %981 = vset.pattern.permute.xlu0 0
        %982 = vperm.xlu0 %981, %v814
        %v983 = vpop.permute.xlu0 %982
        %984 = vset.pattern.permute.xlu0 0
        %985 = vperm.xlu0 %984, %v815
        %v986 = vpop.permute.xlu0 %985
        %987 = vset.pattern.permute.xlu0 0
        %988 = vperm.xlu0 %987, %v816
        %v989 = vpop.permute.xlu0 %988
        %990 = vset.pattern.permute.xlu0 0
        %991 = vperm.xlu0 %990, %v817
        %v992 = vpop.permute.xlu0 %991
        %993 = vset.pattern.permute.xlu0 0
        %994 = vperm.xlu0 %993, %v818
        %v995 = vpop.permute.xlu0 %994
        %996 = vset.pattern.permute.xlu0 0
        %997 = vperm.xlu0 %996, %v819
        %v998 = vpop.permute.xlu0 %997
        %999 = vset.pattern.permute.xlu0 0
        %1000 = vperm.xlu0 %999, %v820
        %v1001 = vpop.permute.xlu0 %1000
        %1002 = vset.pattern.permute.xlu0 0
        %1003 = vperm.xlu0 %1002, %v821
        %v1004 = vpop.permute.xlu0 %1003
        %1005 = vset.pattern.permute.xlu0 0
        %1006 = vperm.xlu0 %1005, %v822
        %v1007 = vpop.permute.xlu0 %1006
        %1008 = vset.pattern.permute.xlu0 0
        %1009 = vperm.xlu0 %1008, %v823
        %v1010 = vpop.permute.xlu0 %1009
        %1011 = vset.pattern.permute.xlu0 0
        %1012 = vperm.xlu0 %1011, %v824
        %v1013 = vpop.permute.xlu0 %1012
        %1014 = vset.pattern.permute.xlu0 0
        %1015 = vperm.xlu0 %1014, %v825
        %v1016 = vpop.permute.xlu0 %1015
        %1017 = vset.pattern.permute.xlu0 0
        %1018 = vperm.xlu0 %1017, %v826
        %v1019 = vpop.permute.xlu0 %1018
        %1020 = vset.pattern.permute.xlu0 0
        %1021 = vperm.xlu0 %1020, %v827
        %v1022 = vpop.permute.xlu0 %1021
        %vm1023 = vcmp.eq.s32.totalorder %v973, %v977
        %vm1024 = vcmp.eq.s32.totalorder %v974, %v977
        %vm1025 = vcmp.eq.s32.totalorder %v973, %v980
        %vm1026 = vcmp.eq.s32.totalorder %v974, %v980
        %vm1027 = vcmp.eq.s32.totalorder %v973, %v983
        %vm1028 = vcmp.eq.s32.totalorder %v974, %v983
        %vm1029 = vcmp.eq.s32.totalorder %v973, %v986
        %vm1030 = vcmp.eq.s32.totalorder %v974, %v986
        %vm1031 = vcmp.eq.s32.totalorder %v973, %v989
        %vm1032 = vcmp.eq.s32.totalorder %v974, %v989
        %vm1033 = vcmp.eq.s32.totalorder %v973, %v992
        %vm1034 = vcmp.eq.s32.totalorder %v974, %v992
        %vm1035 = vcmp.eq.s32.totalorder %v973, %v995
        %vm1036 = vcmp.eq.s32.totalorder %v974, %v995
        %vm1037 = vcmp.eq.s32.totalorder %v973, %v998
        %vm1038 = vcmp.eq.s32.totalorder %v974, %v998
        %vm1039 = vcmp.eq.s32.totalorder %v973, %v1001
        %vm1040 = vcmp.eq.s32.totalorder %v974, %v1001
        %vm1041 = vcmp.eq.s32.totalorder %v973, %v1004
        %vm1042 = vcmp.eq.s32.totalorder %v974, %v1004
        %vm1043 = vcmp.eq.s32.totalorder %v973, %v1007
        %vm1044 = vcmp.eq.s32.totalorder %v974, %v1007
        %vm1045 = vcmp.eq.s32.totalorder %v973, %v1010
        %vm1046 = vcmp.eq.s32.totalorder %v974, %v1010
        %vm1047 = vcmp.eq.s32.totalorder %v973, %v1013
        %vm1048 = vcmp.eq.s32.totalorder %v974, %v1013
        %vm1049 = vcmp.eq.s32.totalorder %v973, %v1016
        %vm1050 = vcmp.eq.s32.totalorder %v974, %v1016
        %vm1051 = vcmp.eq.s32.totalorder %v973, %v1019
        %vm1052 = vcmp.eq.s32.totalorder %v974, %v1019
        %vm1053 = vcmp.eq.s32.totalorder %v973, %v1022
        %vm1054 = vcmp.eq.s32.totalorder %v974, %v1022
        %1056 = vset.pattern.permute.xlu0 1
        %1057 = vperm.xlu0 %1056, %v490
        %v1058 = vpop.permute.xlu0 %1057
        %1061 = vset.pattern.permute.xlu0 1
        %1062 = vperm.xlu0 %1061, %v491
        %v1063 = vpop.permute.xlu0 %1062
        %1066 = vset.pattern.permute.xlu0 1
        %1067 = vperm.xlu0 %1066, %v492
        %v1068 = vpop.permute.xlu0 %1067
        %1071 = vset.pattern.permute.xlu0 1
        %1072 = vperm.xlu0 %1071, %v493
        %v1073 = vpop.permute.xlu0 %1072
        %1076 = vset.pattern.permute.xlu0 1
        %1077 = vperm.xlu0 %1076, %v494
        %v1078 = vpop.permute.xlu0 %1077
        %1081 = vset.pattern.permute.xlu0 1
        %1082 = vperm.xlu0 %1081, %v495
        %v1083 = vpop.permute.xlu0 %1082
        %1086 = vset.pattern.permute.xlu0 1
        %1087 = vperm.xlu0 %1086, %v496
        %v1088 = vpop.permute.xlu0 %1087
        %1091 = vset.pattern.permute.xlu0 1
        %1092 = vperm.xlu0 %1091, %v497
        %v1093 = vpop.permute.xlu0 %1092
        %1096 = vset.pattern.permute.xlu0 1
        %1097 = vperm.xlu0 %1096, %v498
        %v1098 = vpop.permute.xlu0 %1097
        %1101 = vset.pattern.permute.xlu0 1
        %1102 = vperm.xlu0 %1101, %v499
        %v1103 = vpop.permute.xlu0 %1102
        %1106 = vset.pattern.permute.xlu0 1
        %1107 = vperm.xlu0 %1106, %v500
        %v1108 = vpop.permute.xlu0 %1107
        %1111 = vset.pattern.permute.xlu0 1
        %1112 = vperm.xlu0 %1111, %v501
        %v1113 = vpop.permute.xlu0 %1112
        %1116 = vset.pattern.permute.xlu0 1
        %1117 = vperm.xlu0 %1116, %v502
        %v1118 = vpop.permute.xlu0 %1117
        %1121 = vset.pattern.permute.xlu0 1
        %1122 = vperm.xlu0 %1121, %v503
        %v1123 = vpop.permute.xlu0 %1122
        %1126 = vset.pattern.permute.xlu0 1
        %1127 = vperm.xlu0 %1126, %v504
        %v1128 = vpop.permute.xlu0 %1127
        %1131 = vset.pattern.permute.xlu0 1
        %1132 = vperm.xlu0 %1131, %v505
        %v1133 = vpop.permute.xlu0 %1132
        %v1135 = vsel %vm1023, %v1058, 0.0
        %v1136 = vsel %vm1024, %v1058, 0.0
        %v1137 = vsel %vm1025, %v1063, 0.0
        %v1138 = vsel %vm1026, %v1063, 0.0
        %v1139 = vsel %vm1027, %v1068, 0.0
        %v1140 = vsel %vm1028, %v1068, 0.0
        %v1141 = vsel %vm1029, %v1073, 0.0
        %v1142 = vsel %vm1030, %v1073, 0.0
        %v1143 = vsel %vm1031, %v1078, 0.0
        %v1144 = vsel %vm1032, %v1078, 0.0
        %v1145 = vsel %vm1033, %v1083, 0.0
        %v1146 = vsel %vm1034, %v1083, 0.0
        %v1147 = vsel %vm1035, %v1088, 0.0
        %v1148 = vsel %vm1036, %v1088, 0.0
        %v1149 = vsel %vm1037, %v1093, 0.0
        %v1150 = vsel %vm1038, %v1093, 0.0
        %v1151 = vsel %vm1039, %v1098, 0.0
        %v1152 = vsel %vm1040, %v1098, 0.0
        %v1153 = vsel %vm1041, %v1103, 0.0
        %v1154 = vsel %vm1042, %v1103, 0.0
        %v1155 = vsel %vm1043, %v1108, 0.0
        %v1156 = vsel %vm1044, %v1108, 0.0
        %v1157 = vsel %vm1045, %v1113, 0.0
        %v1158 = vsel %vm1046, %v1113, 0.0
        %v1159 = vsel %vm1047, %v1118, 0.0
        %v1160 = vsel %vm1048, %v1118, 0.0
        %v1161 = vsel %vm1049, %v1123, 0.0
        %v1162 = vsel %vm1050, %v1123, 0.0
        %v1163 = vsel %vm1051, %v1128, 0.0
        %v1164 = vsel %vm1052, %v1128, 0.0
        %v1165 = vsel %vm1053, %v1133, 0.0
        %v1166 = vsel %vm1054, %v1133, 0.0
        %1167 = vset.pattern.permute.xlu0 0
        %1168 = vperm.xlu0 %1167, %v892
        %v1169 = vpop.permute.xlu0 %1168
        %1170 = vset.pattern.permute.xlu0 0
        %1171 = vperm.xlu0 %1170, %v893
        %v1172 = vpop.permute.xlu0 %1171
        %1173 = vset.pattern.permute.xlu0 0
        %1174 = vperm.xlu0 %1173, %v894
        %v1175 = vpop.permute.xlu0 %1174
        %1176 = vset.pattern.permute.xlu0 0
        %1177 = vperm.xlu0 %1176, %v895
        %v1178 = vpop.permute.xlu0 %1177
        %1179 = vset.pattern.permute.xlu0 0
        %1180 = vperm.xlu0 %1179, %v896
        %v1181 = vpop.permute.xlu0 %1180
        %1182 = vset.pattern.permute.xlu0 0
        %1183 = vperm.xlu0 %1182, %v897
        %v1184 = vpop.permute.xlu0 %1183
        %1185 = vset.pattern.permute.xlu0 0
        %1186 = vperm.xlu0 %1185, %v898
        %v1187 = vpop.permute.xlu0 %1186
        %1188 = vset.pattern.permute.xlu0 0
        %1189 = vperm.xlu0 %1188, %v899
        %v1190 = vpop.permute.xlu0 %1189
        %1191 = vset.pattern.permute.xlu0 0
        %1192 = vperm.xlu0 %1191, %v900
        %v1193 = vpop.permute.xlu0 %1192
        %1194 = vset.pattern.permute.xlu0 0
        %1195 = vperm.xlu0 %1194, %v901
        %v1196 = vpop.permute.xlu0 %1195
        %1197 = vset.pattern.permute.xlu0 0
        %1198 = vperm.xlu0 %1197, %v902
        %v1199 = vpop.permute.xlu0 %1198
        %1200 = vset.pattern.permute.xlu0 0
        %1201 = vperm.xlu0 %1200, %v903
        %v1202 = vpop.permute.xlu0 %1201
        %1203 = vset.pattern.permute.xlu0 0
        %1204 = vperm.xlu0 %1203, %v904
        %v1205 = vpop.permute.xlu0 %1204
        %1206 = vset.pattern.permute.xlu0 0
        %1207 = vperm.xlu0 %1206, %v905
        %v1208 = vpop.permute.xlu0 %1207
        %1209 = vset.pattern.permute.xlu0 0
        %1210 = vperm.xlu0 %1209, %v906
        %v1211 = vpop.permute.xlu0 %1210
        %1212 = vset.pattern.permute.xlu0 0
        %1213 = vperm.xlu0 %1212, %v907
        %v1214 = vpop.permute.xlu0 %1213
        %vm1215 = vcmp.eq.s32.totalorder %v973, %v1169
        %vm1216 = vcmp.eq.s32.totalorder %v974, %v1169
        %vm1217 = vcmp.eq.s32.totalorder %v973, %v1172
        %vm1218 = vcmp.eq.s32.totalorder %v974, %v1172
        %vm1219 = vcmp.eq.s32.totalorder %v973, %v1175
        %vm1220 = vcmp.eq.s32.totalorder %v974, %v1175
        %vm1221 = vcmp.eq.s32.totalorder %v973, %v1178
        %vm1222 = vcmp.eq.s32.totalorder %v974, %v1178
        %vm1223 = vcmp.eq.s32.totalorder %v973, %v1181
        %vm1224 = vcmp.eq.s32.totalorder %v974, %v1181
        %vm1225 = vcmp.eq.s32.totalorder %v973, %v1184
        %vm1226 = vcmp.eq.s32.totalorder %v974, %v1184
        %vm1227 = vcmp.eq.s32.totalorder %v973, %v1187
        %vm1228 = vcmp.eq.s32.totalorder %v974, %v1187
        %vm1229 = vcmp.eq.s32.totalorder %v973, %v1190
        %vm1230 = vcmp.eq.s32.totalorder %v974, %v1190
        %vm1231 = vcmp.eq.s32.totalorder %v973, %v1193
        %vm1232 = vcmp.eq.s32.totalorder %v974, %v1193
        %vm1233 = vcmp.eq.s32.totalorder %v973, %v1196
        %vm1234 = vcmp.eq.s32.totalorder %v974, %v1196
        %vm1235 = vcmp.eq.s32.totalorder %v973, %v1199
        %vm1236 = vcmp.eq.s32.totalorder %v974, %v1199
        %vm1237 = vcmp.eq.s32.totalorder %v973, %v1202
        %vm1238 = vcmp.eq.s32.totalorder %v974, %v1202
        %vm1239 = vcmp.eq.s32.totalorder %v973, %v1205
        %vm1240 = vcmp.eq.s32.totalorder %v974, %v1205
        %vm1241 = vcmp.eq.s32.totalorder %v973, %v1208
        %vm1242 = vcmp.eq.s32.totalorder %v974, %v1208
        %vm1243 = vcmp.eq.s32.totalorder %v973, %v1211
        %vm1244 = vcmp.eq.s32.totalorder %v974, %v1211
        %vm1245 = vcmp.eq.s32.totalorder %v973, %v1214
        %vm1246 = vcmp.eq.s32.totalorder %v974, %v1214
        %1248 = vset.pattern.permute.xlu0 1
        %1249 = vperm.xlu0 %1248, %v586
        %v1250 = vpop.permute.xlu0 %1249
        %1253 = vset.pattern.permute.xlu0 1
        %1254 = vperm.xlu0 %1253, %v587
        %v1255 = vpop.permute.xlu0 %1254
        %1258 = vset.pattern.permute.xlu0 1
        %1259 = vperm.xlu0 %1258, %v588
        %v1260 = vpop.permute.xlu0 %1259
        %1263 = vset.pattern.permute.xlu0 1
        %1264 = vperm.xlu0 %1263, %v589
        %v1265 = vpop.permute.xlu0 %1264
        %1268 = vset.pattern.permute.xlu0 1
        %1269 = vperm.xlu0 %1268, %v590
        %v1270 = vpop.permute.xlu0 %1269
        %1273 = vset.pattern.permute.xlu0 1
        %1274 = vperm.xlu0 %1273, %v591
        %v1275 = vpop.permute.xlu0 %1274
        %1278 = vset.pattern.permute.xlu0 1
        %1279 = vperm.xlu0 %1278, %v592
        %v1280 = vpop.permute.xlu0 %1279
        %1283 = vset.pattern.permute.xlu0 1
        %1284 = vperm.xlu0 %1283, %v593
        %v1285 = vpop.permute.xlu0 %1284
        %1288 = vset.pattern.permute.xlu0 1
        %1289 = vperm.xlu0 %1288, %v594
        %v1290 = vpop.permute.xlu0 %1289
        %1293 = vset.pattern.permute.xlu0 1
        %1294 = vperm.xlu0 %1293, %v595
        %v1295 = vpop.permute.xlu0 %1294
        %1298 = vset.pattern.permute.xlu0 1
        %1299 = vperm.xlu0 %1298, %v596
        %v1300 = vpop.permute.xlu0 %1299
        %1303 = vset.pattern.permute.xlu0 1
        %1304 = vperm.xlu0 %1303, %v597
        %v1305 = vpop.permute.xlu0 %1304
        %1308 = vset.pattern.permute.xlu0 1
        %1309 = vperm.xlu0 %1308, %v598
        %v1310 = vpop.permute.xlu0 %1309
        %1313 = vset.pattern.permute.xlu0 1
        %1314 = vperm.xlu0 %1313, %v599
        %v1315 = vpop.permute.xlu0 %1314
        %1318 = vset.pattern.permute.xlu0 1
        %1319 = vperm.xlu0 %1318, %v600
        %v1320 = vpop.permute.xlu0 %1319
        %1323 = vset.pattern.permute.xlu0 1
        %1324 = vperm.xlu0 %1323, %v601
        %v1325 = vpop.permute.xlu0 %1324
        %v1327 = vsel %vm1215, %v1250, 0.0
        %v1328 = vsel %vm1216, %v1250, 0.0
        %v1329 = vsel %vm1217, %v1255, 0.0
        %v1330 = vsel %vm1218, %v1255, 0.0
        %v1331 = vsel %vm1219, %v1260, 0.0
        %v1332 = vsel %vm1220, %v1260, 0.0
        %v1333 = vsel %vm1221, %v1265, 0.0
        %v1334 = vsel %vm1222, %v1265, 0.0
        %v1335 = vsel %vm1223, %v1270, 0.0
        %v1336 = vsel %vm1224, %v1270, 0.0
        %v1337 = vsel %vm1225, %v1275, 0.0
        %v1338 = vsel %vm1226, %v1275, 0.0
        %v1339 = vsel %vm1227, %v1280, 0.0
        %v1340 = vsel %vm1228, %v1280, 0.0
        %v1341 = vsel %vm1229, %v1285, 0.0
        %v1342 = vsel %vm1230, %v1285, 0.0
        %v1343 = vsel %vm1231, %v1290, 0.0
        %v1344 = vsel %vm1232, %v1290, 0.0
        %v1345 = vsel %vm1233, %v1295, 0.0
        %v1346 = vsel %vm1234, %v1295, 0.0
        %v1347 = vsel %vm1235, %v1300, 0.0
        %v1348 = vsel %vm1236, %v1300, 0.0
        %v1349 = vsel %vm1237, %v1305, 0.0
        %v1350 = vsel %vm1238, %v1305, 0.0
        %v1351 = vsel %vm1239, %v1310, 0.0
        %v1352 = vsel %vm1240, %v1310, 0.0
        %v1353 = vsel %vm1241, %v1315, 0.0
        %v1354 = vsel %vm1242, %v1315, 0.0
        %v1355 = vsel %vm1243, %v1320, 0.0
        %v1356 = vsel %vm1244, %v1320, 0.0
        %v1357 = vsel %vm1245, %v1325, 0.0
        %v1358 = vsel %vm1246, %v1325, 0.0
        %v1359 = vadd.f32 %v1135, %v1327
        %v1360 = vadd.f32 %v1136, %v1328
        %v1361 = vadd.f32 %v1137, %v1329
        %v1362 = vadd.f32 %v1138, %v1330
        %v1363 = vadd.f32 %v1139, %v1331
        %v1364 = vadd.f32 %v1140, %v1332
        %v1365 = vadd.f32 %v1141, %v1333
        %v1366 = vadd.f32 %v1142, %v1334
        %v1367 = vadd.f32 %v1143, %v1335
        %v1368 = vadd.f32 %v1144, %v1336
        %v1369 = vadd.f32 %v1145, %v1337
        %v1370 = vadd.f32 %v1146, %v1338
        %v1371 = vadd.f32 %v1147, %v1339
        %v1372 = vadd.f32 %v1148, %v1340
        %v1373 = vadd.f32 %v1149, %v1341
        %v1374 = vadd.f32 %v1150, %v1342
        %v1375 = vadd.f32 %v1151, %v1343
        %v1376 = vadd.f32 %v1152, %v1344
        %v1377 = vadd.f32 %v1153, %v1345
        %v1378 = vadd.f32 %v1154, %v1346
        %v1379 = vadd.f32 %v1155, %v1347
        %v1380 = vadd.f32 %v1156, %v1348
        %v1381 = vadd.f32 %v1157, %v1349
        %v1382 = vadd.f32 %v1158, %v1350
        %v1383 = vadd.f32 %v1159, %v1351
        %v1384 = vadd.f32 %v1160, %v1352
        %v1385 = vadd.f32 %v1161, %v1353
        %v1386 = vadd.f32 %v1162, %v1354
        %v1387 = vadd.f32 %v1163, %v1355
        %v1388 = vadd.f32 %v1164, %v1356
        %v1389 = vadd.f32 %v1165, %v1357
        %v1390 = vadd.f32 %v1166, %v1358
        %1391 = vset.pattern.permute.xlu0 0
        %1392 = vperm.xlu0 %1391, %v940
        %v1393 = vpop.permute.xlu0 %1392
        %1394 = vset.pattern.permute.xlu0 0
        %1395 = vperm.xlu0 %1394, %v941
        %v1396 = vpop.permute.xlu0 %1395
        %1397 = vset.pattern.permute.xlu0 0
        %1398 = vperm.xlu0 %1397, %v942
        %v1399 = vpop.permute.xlu0 %1398
        %1400 = vset.pattern.permute.xlu0 0
        %1401 = vperm.xlu0 %1400, %v943
        %v1402 = vpop.permute.xlu0 %1401
        %1403 = vset.pattern.permute.xlu0 0
        %1404 = vperm.xlu0 %1403, %v944
        %v1405 = vpop.permute.xlu0 %1404
        %1406 = vset.pattern.permute.xlu0 0
        %1407 = vperm.xlu0 %1406, %v945
        %v1408 = vpop.permute.xlu0 %1407
        %1409 = vset.pattern.permute.xlu0 0
        %1410 = vperm.xlu0 %1409, %v946
        %v1411 = vpop.permute.xlu0 %1410
        %1412 = vset.pattern.permute.xlu0 0
        %1413 = vperm.xlu0 %1412, %v947
        %v1414 = vpop.permute.xlu0 %1413
        %1415 = vset.pattern.permute.xlu0 0
        %1416 = vperm.xlu0 %1415, %v948
        %v1417 = vpop.permute.xlu0 %1416
        %1418 = vset.pattern.permute.xlu0 0
        %1419 = vperm.xlu0 %1418, %v949
        %v1420 = vpop.permute.xlu0 %1419
        %1421 = vset.pattern.permute.xlu0 0
        %1422 = vperm.xlu0 %1421, %v950
        %v1423 = vpop.permute.xlu0 %1422
        %1424 = vset.pattern.permute.xlu0 0
        %1425 = vperm.xlu0 %1424, %v951
        %v1426 = vpop.permute.xlu0 %1425
        %1427 = vset.pattern.permute.xlu0 0
        %1428 = vperm.xlu0 %1427, %v952
        %v1429 = vpop.permute.xlu0 %1428
        %1430 = vset.pattern.permute.xlu0 0
        %1431 = vperm.xlu0 %1430, %v953
        %v1432 = vpop.permute.xlu0 %1431
        %1433 = vset.pattern.permute.xlu0 0
        %1434 = vperm.xlu0 %1433, %v954
        %v1435 = vpop.permute.xlu0 %1434
        %1436 = vset.pattern.permute.xlu0 0
        %1437 = vperm.xlu0 %1436, %v955
        %v1438 = vpop.permute.xlu0 %1437
        %vm1439 = vcmp.eq.s32.totalorder %v973, %v1393
        %vm1440 = vcmp.eq.s32.totalorder %v974, %v1393
        %vm1441 = vcmp.eq.s32.totalorder %v973, %v1396
        %vm1442 = vcmp.eq.s32.totalorder %v974, %v1396
        %vm1443 = vcmp.eq.s32.totalorder %v973, %v1399
        %vm1444 = vcmp.eq.s32.totalorder %v974, %v1399
        %vm1445 = vcmp.eq.s32.totalorder %v973, %v1402
        %vm1446 = vcmp.eq.s32.totalorder %v974, %v1402
        %vm1447 = vcmp.eq.s32.totalorder %v973, %v1405
        %vm1448 = vcmp.eq.s32.totalorder %v974, %v1405
        %vm1449 = vcmp.eq.s32.totalorder %v973, %v1408
        %vm1450 = vcmp.eq.s32.totalorder %v974, %v1408
        %vm1451 = vcmp.eq.s32.totalorder %v973, %v1411
        %vm1452 = vcmp.eq.s32.totalorder %v974, %v1411
        %vm1453 = vcmp.eq.s32.totalorder %v973, %v1414
        %vm1454 = vcmp.eq.s32.totalorder %v974, %v1414
        %vm1455 = vcmp.eq.s32.totalorder %v973, %v1417
        %vm1456 = vcmp.eq.s32.totalorder %v974, %v1417
        %vm1457 = vcmp.eq.s32.totalorder %v973, %v1420
        %vm1458 = vcmp.eq.s32.totalorder %v974, %v1420
        %vm1459 = vcmp.eq.s32.totalorder %v973, %v1423
        %vm1460 = vcmp.eq.s32.totalorder %v974, %v1423
        %vm1461 = vcmp.eq.s32.totalorder %v973, %v1426
        %vm1462 = vcmp.eq.s32.totalorder %v974, %v1426
        %vm1463 = vcmp.eq.s32.totalorder %v973, %v1429
        %vm1464 = vcmp.eq.s32.totalorder %v974, %v1429
        %vm1465 = vcmp.eq.s32.totalorder %v973, %v1432
        %vm1466 = vcmp.eq.s32.totalorder %v974, %v1432
        %vm1467 = vcmp.eq.s32.totalorder %v973, %v1435
        %vm1468 = vcmp.eq.s32.totalorder %v974, %v1435
        %vm1469 = vcmp.eq.s32.totalorder %v973, %v1438
        %vm1470 = vcmp.eq.s32.totalorder %v974, %v1438
        %1472 = vset.pattern.permute.xlu0 1
        %1473 = vperm.xlu0 %1472, %v602
        %v1474 = vpop.permute.xlu0 %1473
        %1477 = vset.pattern.permute.xlu0 1
        %1478 = vperm.xlu0 %1477, %v603
        %v1479 = vpop.permute.xlu0 %1478
        %1482 = vset.pattern.permute.xlu0 1
        %1483 = vperm.xlu0 %1482, %v604
        %v1484 = vpop.permute.xlu0 %1483
        %1487 = vset.pattern.permute.xlu0 1
        %1488 = vperm.xlu0 %1487, %v605
        %v1489 = vpop.permute.xlu0 %1488
        %1492 = vset.pattern.permute.xlu0 1
        %1493 = vperm.xlu0 %1492, %v606
        %v1494 = vpop.permute.xlu0 %1493
        %1497 = vset.pattern.permute.xlu0 1
        %1498 = vperm.xlu0 %1497, %v607
        %v1499 = vpop.permute.xlu0 %1498
        %1502 = vset.pattern.permute.xlu0 1
        %1503 = vperm.xlu0 %1502, %v608
        %v1504 = vpop.permute.xlu0 %1503
        %1507 = vset.pattern.permute.xlu0 1
        %1508 = vperm.xlu0 %1507, %v609
        %v1509 = vpop.permute.xlu0 %1508
        %1512 = vset.pattern.permute.xlu0 1
        %1513 = vperm.xlu0 %1512, %v610
        %v1514 = vpop.permute.xlu0 %1513
        %1517 = vset.pattern.permute.xlu0 1
        %1518 = vperm.xlu0 %1517, %v611
        %v1519 = vpop.permute.xlu0 %1518
        %1522 = vset.pattern.permute.xlu0 1
        %1523 = vperm.xlu0 %1522, %v612
        %v1524 = vpop.permute.xlu0 %1523
        %1527 = vset.pattern.permute.xlu0 1
        %1528 = vperm.xlu0 %1527, %v613
        %v1529 = vpop.permute.xlu0 %1528
        %1532 = vset.pattern.permute.xlu0 1
        %1533 = vperm.xlu0 %1532, %v614
        %v1534 = vpop.permute.xlu0 %1533
        %1537 = vset.pattern.permute.xlu0 1
        %1538 = vperm.xlu0 %1537, %v615
        %v1539 = vpop.permute.xlu0 %1538
        %1542 = vset.pattern.permute.xlu0 1
        %1543 = vperm.xlu0 %1542, %v616
        %v1544 = vpop.permute.xlu0 %1543
        %1547 = vset.pattern.permute.xlu0 1
        %1548 = vperm.xlu0 %1547, %v617
        %v1549 = vpop.permute.xlu0 %1548
        %v1551 = vsel %vm1439, %v1474, 0.0
        %v1552 = vsel %vm1440, %v1474, 0.0
        %v1553 = vsel %vm1441, %v1479, 0.0
        %v1554 = vsel %vm1442, %v1479, 0.0
        %v1555 = vsel %vm1443, %v1484, 0.0
        %v1556 = vsel %vm1444, %v1484, 0.0
        %v1557 = vsel %vm1445, %v1489, 0.0
        %v1558 = vsel %vm1446, %v1489, 0.0
        %v1559 = vsel %vm1447, %v1494, 0.0
        %v1560 = vsel %vm1448, %v1494, 0.0
        %v1561 = vsel %vm1449, %v1499, 0.0
        %v1562 = vsel %vm1450, %v1499, 0.0
        %v1563 = vsel %vm1451, %v1504, 0.0
        %v1564 = vsel %vm1452, %v1504, 0.0
        %v1565 = vsel %vm1453, %v1509, 0.0
        %v1566 = vsel %vm1454, %v1509, 0.0
        %v1567 = vsel %vm1455, %v1514, 0.0
        %v1568 = vsel %vm1456, %v1514, 0.0
        %v1569 = vsel %vm1457, %v1519, 0.0
        %v1570 = vsel %vm1458, %v1519, 0.0
        %v1571 = vsel %vm1459, %v1524, 0.0
        %v1572 = vsel %vm1460, %v1524, 0.0
        %v1573 = vsel %vm1461, %v1529, 0.0
        %v1574 = vsel %vm1462, %v1529, 0.0
        %v1575 = vsel %vm1463, %v1534, 0.0
        %v1576 = vsel %vm1464, %v1534, 0.0
        %v1577 = vsel %vm1465, %v1539, 0.0
        %v1578 = vsel %vm1466, %v1539, 0.0
        %v1579 = vsel %vm1467, %v1544, 0.0
        %v1580 = vsel %vm1468, %v1544, 0.0
        %v1581 = vsel %vm1469, %v1549, 0.0
        %v1582 = vsel %vm1470, %v1549, 0.0
        %v1583 = vadd.f32 %v1359, %v1551
        %v1584 = vadd.f32 %v1360, %v1552
        %v1585 = vadd.f32 %v1361, %v1553
        %v1586 = vadd.f32 %v1362, %v1554
        %v1587 = vadd.f32 %v1363, %v1555
        %v1588 = vadd.f32 %v1364, %v1556
        %v1589 = vadd.f32 %v1365, %v1557
        %v1590 = vadd.f32 %v1366, %v1558
        %v1591 = vadd.f32 %v1367, %v1559
        %v1592 = vadd.f32 %v1368, %v1560
        %v1593 = vadd.f32 %v1369, %v1561
        %v1594 = vadd.f32 %v1370, %v1562
        %v1595 = vadd.f32 %v1371, %v1563
        %v1596 = vadd.f32 %v1372, %v1564
        %v1597 = vadd.f32 %v1373, %v1565
        %v1598 = vadd.f32 %v1374, %v1566
        %v1599 = vadd.f32 %v1375, %v1567
        %v1600 = vadd.f32 %v1376, %v1568
        %v1601 = vadd.f32 %v1377, %v1569
        %v1602 = vadd.f32 %v1378, %v1570
        %v1603 = vadd.f32 %v1379, %v1571
        %v1604 = vadd.f32 %v1380, %v1572
        %v1605 = vadd.f32 %v1381, %v1573
        %v1606 = vadd.f32 %v1382, %v1574
        %v1607 = vadd.f32 %v1383, %v1575
        %v1608 = vadd.f32 %v1384, %v1576
        %v1609 = vadd.f32 %v1385, %v1577
        %v1610 = vadd.f32 %v1386, %v1578
        %v1611 = vadd.f32 %v1387, %v1579
        %v1612 = vadd.f32 %v1388, %v1580
        %v1613 = vadd.f32 %v1389, %v1581
        %v1614 = vadd.f32 %v1390, %v1582
        %1615 = vset.pattern.permute.xlu0 0
        %1616 = vperm.xlu0 %1615, %v956
        %v1617 = vpop.permute.xlu0 %1616
        %1618 = vset.pattern.permute.xlu0 0
        %1619 = vperm.xlu0 %1618, %v957
        %v1620 = vpop.permute.xlu0 %1619
        %1621 = vset.pattern.permute.xlu0 0
        %1622 = vperm.xlu0 %1621, %v958
        %v1623 = vpop.permute.xlu0 %1622
        %1624 = vset.pattern.permute.xlu0 0
        %1625 = vperm.xlu0 %1624, %v959
        %v1626 = vpop.permute.xlu0 %1625
        %1627 = vset.pattern.permute.xlu0 0
        %1628 = vperm.xlu0 %1627, %v960
        %v1629 = vpop.permute.xlu0 %1628
        %1630 = vset.pattern.permute.xlu0 0
        %1631 = vperm.xlu0 %1630, %v961
        %v1632 = vpop.permute.xlu0 %1631
        %1633 = vset.pattern.permute.xlu0 0
        %1634 = vperm.xlu0 %1633, %v962
        %v1635 = vpop.permute.xlu0 %1634
        %1636 = vset.pattern.permute.xlu0 0
        %1637 = vperm.xlu0 %1636, %v963
        %v1638 = vpop.permute.xlu0 %1637
        %1639 = vset.pattern.permute.xlu0 0
        %1640 = vperm.xlu0 %1639, %v964
        %v1641 = vpop.permute.xlu0 %1640
        %1642 = vset.pattern.permute.xlu0 0
        %1643 = vperm.xlu0 %1642, %v965
        %v1644 = vpop.permute.xlu0 %1643
        %1645 = vset.pattern.permute.xlu0 0
        %1646 = vperm.xlu0 %1645, %v966
        %v1647 = vpop.permute.xlu0 %1646
        %1648 = vset.pattern.permute.xlu0 0
        %1649 = vperm.xlu0 %1648, %v967
        %v1650 = vpop.permute.xlu0 %1649
        %1651 = vset.pattern.permute.xlu0 0
        %1652 = vperm.xlu0 %1651, %v968
        %v1653 = vpop.permute.xlu0 %1652
        %1654 = vset.pattern.permute.xlu0 0
        %1655 = vperm.xlu0 %1654, %v969
        %v1656 = vpop.permute.xlu0 %1655
        %1657 = vset.pattern.permute.xlu0 0
        %1658 = vperm.xlu0 %1657, %v970
        %v1659 = vpop.permute.xlu0 %1658
        %1660 = vset.pattern.permute.xlu0 0
        %1661 = vperm.xlu0 %1660, %v971
        %v1662 = vpop.permute.xlu0 %1661
        %vm1663 = vcmp.eq.s32.totalorder %v973, %v1617
        %vm1664 = vcmp.eq.s32.totalorder %v974, %v1617
        %vm1665 = vcmp.eq.s32.totalorder %v973, %v1620
        %vm1666 = vcmp.eq.s32.totalorder %v974, %v1620
        %vm1667 = vcmp.eq.s32.totalorder %v973, %v1623
        %vm1668 = vcmp.eq.s32.totalorder %v974, %v1623
        %vm1669 = vcmp.eq.s32.totalorder %v973, %v1626
        %vm1670 = vcmp.eq.s32.totalorder %v974, %v1626
        %vm1671 = vcmp.eq.s32.totalorder %v973, %v1629
        %vm1672 = vcmp.eq.s32.totalorder %v974, %v1629
        %vm1673 = vcmp.eq.s32.totalorder %v973, %v1632
        %vm1674 = vcmp.eq.s32.totalorder %v974, %v1632
        %vm1675 = vcmp.eq.s32.totalorder %v973, %v1635
        %vm1676 = vcmp.eq.s32.totalorder %v974, %v1635
        %vm1677 = vcmp.eq.s32.totalorder %v973, %v1638
        %vm1678 = vcmp.eq.s32.totalorder %v974, %v1638
        %vm1679 = vcmp.eq.s32.totalorder %v973, %v1641
        %vm1680 = vcmp.eq.s32.totalorder %v974, %v1641
        %vm1681 = vcmp.eq.s32.totalorder %v973, %v1644
        %vm1682 = vcmp.eq.s32.totalorder %v974, %v1644
        %vm1683 = vcmp.eq.s32.totalorder %v973, %v1647
        %vm1684 = vcmp.eq.s32.totalorder %v974, %v1647
        %vm1685 = vcmp.eq.s32.totalorder %v973, %v1650
        %vm1686 = vcmp.eq.s32.totalorder %v974, %v1650
        %vm1687 = vcmp.eq.s32.totalorder %v973, %v1653
        %vm1688 = vcmp.eq.s32.totalorder %v974, %v1653
        %vm1689 = vcmp.eq.s32.totalorder %v973, %v1656
        %vm1690 = vcmp.eq.s32.totalorder %v974, %v1656
        %vm1691 = vcmp.eq.s32.totalorder %v973, %v1659
        %vm1692 = vcmp.eq.s32.totalorder %v974, %v1659
        %vm1693 = vcmp.eq.s32.totalorder %v973, %v1662
        %vm1694 = vcmp.eq.s32.totalorder %v974, %v1662
        %1696 = vset.pattern.permute.xlu0 1
        %1697 = vperm.xlu0 %1696, %v618
        %v1698 = vpop.permute.xlu0 %1697
        %1701 = vset.pattern.permute.xlu0 1
        %1702 = vperm.xlu0 %1701, %v619
        %v1703 = vpop.permute.xlu0 %1702
        %1706 = vset.pattern.permute.xlu0 1
        %1707 = vperm.xlu0 %1706, %v620
        %v1708 = vpop.permute.xlu0 %1707
        %1711 = vset.pattern.permute.xlu0 1
        %1712 = vperm.xlu0 %1711, %v621
        %v1713 = vpop.permute.xlu0 %1712
        %1716 = vset.pattern.permute.xlu0 1
        %1717 = vperm.xlu0 %1716, %v622
        %v1718 = vpop.permute.xlu0 %1717
        %1721 = vset.pattern.permute.xlu0 1
        %1722 = vperm.xlu0 %1721, %v623
        %v1723 = vpop.permute.xlu0 %1722
        %1726 = vset.pattern.permute.xlu0 1
        %1727 = vperm.xlu0 %1726, %v624
        %v1728 = vpop.permute.xlu0 %1727
        %1731 = vset.pattern.permute.xlu0 1
        %1732 = vperm.xlu0 %1731, %v625
        %v1733 = vpop.permute.xlu0 %1732
        %1736 = vset.pattern.permute.xlu0 1
        %1737 = vperm.xlu0 %1736, %v626
        %v1738 = vpop.permute.xlu0 %1737
        %1741 = vset.pattern.permute.xlu0 1
        %1742 = vperm.xlu0 %1741, %v627
        %v1743 = vpop.permute.xlu0 %1742
        %1746 = vset.pattern.permute.xlu0 1
        %1747 = vperm.xlu0 %1746, %v628
        %v1748 = vpop.permute.xlu0 %1747
        %1751 = vset.pattern.permute.xlu0 1
        %1752 = vperm.xlu0 %1751, %v629
        %v1753 = vpop.permute.xlu0 %1752
        %1756 = vset.pattern.permute.xlu0 1
        %1757 = vperm.xlu0 %1756, %v630
        %v1758 = vpop.permute.xlu0 %1757
        %1761 = vset.pattern.permute.xlu0 1
        %1762 = vperm.xlu0 %1761, %v631
        %v1763 = vpop.permute.xlu0 %1762
        %1766 = vset.pattern.permute.xlu0 1
        %1767 = vperm.xlu0 %1766, %v632
        %v1768 = vpop.permute.xlu0 %1767
        %1771 = vset.pattern.permute.xlu0 1
        %1772 = vperm.xlu0 %1771, %v633
        %v1773 = vpop.permute.xlu0 %1772
        %v1775 = vsel %vm1663, %v1698, 0.0
        %v1776 = vsel %vm1664, %v1698, 0.0
        %v1777 = vsel %vm1665, %v1703, 0.0
        %v1778 = vsel %vm1666, %v1703, 0.0
        %v1779 = vsel %vm1667, %v1708, 0.0
        %v1780 = vsel %vm1668, %v1708, 0.0
        %v1781 = vsel %vm1669, %v1713, 0.0
        %v1782 = vsel %vm1670, %v1713, 0.0
        %v1783 = vsel %vm1671, %v1718, 0.0
        %v1784 = vsel %vm1672, %v1718, 0.0
        %v1785 = vsel %vm1673, %v1723, 0.0
        %v1786 = vsel %vm1674, %v1723, 0.0
        %v1787 = vsel %vm1675, %v1728, 0.0
        %v1788 = vsel %vm1676, %v1728, 0.0
        %v1789 = vsel %vm1677, %v1733, 0.0
        %v1790 = vsel %vm1678, %v1733, 0.0
        %v1791 = vsel %vm1679, %v1738, 0.0
        %v1792 = vsel %vm1680, %v1738, 0.0
        %v1793 = vsel %vm1681, %v1743, 0.0
        %v1794 = vsel %vm1682, %v1743, 0.0
        %v1795 = vsel %vm1683, %v1748, 0.0
        %v1796 = vsel %vm1684, %v1748, 0.0
        %v1797 = vsel %vm1685, %v1753, 0.0
        %v1798 = vsel %vm1686, %v1753, 0.0
        %v1799 = vsel %vm1687, %v1758, 0.0
        %v1800 = vsel %vm1688, %v1758, 0.0
        %v1801 = vsel %vm1689, %v1763, 0.0
        %v1802 = vsel %vm1690, %v1763, 0.0
        %v1803 = vsel %vm1691, %v1768, 0.0
        %v1804 = vsel %vm1692, %v1768, 0.0
        %v1805 = vsel %vm1693, %v1773, 0.0
        %v1806 = vsel %vm1694, %v1773, 0.0
        %v1807 = vadd.f32 %v1583, %v1775
        %v1808 = vadd.f32 %v1584, %v1776
        %v1809 = vadd.f32 %v1585, %v1777
        %v1810 = vadd.f32 %v1586, %v1778
        %v1811 = vadd.f32 %v1587, %v1779
        %v1812 = vadd.f32 %v1588, %v1780
        %v1813 = vadd.f32 %v1589, %v1781
        %v1814 = vadd.f32 %v1590, %v1782
        %v1815 = vadd.f32 %v1591, %v1783
        %v1816 = vadd.f32 %v1592, %v1784
        %v1817 = vadd.f32 %v1593, %v1785
        %v1818 = vadd.f32 %v1594, %v1786
        %v1819 = vadd.f32 %v1595, %v1787
        %v1820 = vadd.f32 %v1596, %v1788
        %v1821 = vadd.f32 %v1597, %v1789
        %v1822 = vadd.f32 %v1598, %v1790
        %v1823 = vadd.f32 %v1599, %v1791
        %v1824 = vadd.f32 %v1600, %v1792
        %v1825 = vadd.f32 %v1601, %v1793
        %v1826 = vadd.f32 %v1602, %v1794
        %v1827 = vadd.f32 %v1603, %v1795
        %v1828 = vadd.f32 %v1604, %v1796
        %v1829 = vadd.f32 %v1605, %v1797
        %v1830 = vadd.f32 %v1606, %v1798
        %v1831 = vadd.f32 %v1607, %v1799
        %v1832 = vadd.f32 %v1608, %v1800
        %v1833 = vadd.f32 %v1609, %v1801
        %v1834 = vadd.f32 %v1610, %v1802
        %v1835 = vadd.f32 %v1611, %v1803
        %v1836 = vadd.f32 %v1612, %v1804
        %v1837 = vadd.f32 %v1613, %v1805
        %v1838 = vadd.f32 %v1614, %v1806
        %v1839 = vld [vmem:[#allocation5] sm:$0xff]
        %v1840 = vld [vmem:[#allocation5 + $0x8] sm:$0xff]
        %v1841 = vld [vmem:[#allocation5 + $0x10] sm:$0xff]
        %v1842 = vld [vmem:[#allocation5 + $0x18] sm:$0xff]
        %v1843 = vld [vmem:[#allocation5 + $0x20] sm:$0xff]
        %v1844 = vld [vmem:[#allocation5 + $0x28] sm:$0xff]
        %v1845 = vld [vmem:[#allocation5 + $0x30] sm:$0xff]
        %v1846 = vld [vmem:[#allocation5 + $0x38] sm:$0xff]
        %v1847 = vld [vmem:[#allocation5 + $0x40] sm:$0xff]
        %v1848 = vld [vmem:[#allocation5 + $0x48] sm:$0xff]
        %v1849 = vld [vmem:[#allocation5 + $0x50] sm:$0xff]
        %v1850 = vld [vmem:[#allocation5 + $0x58] sm:$0xff]
        %v1851 = vld [vmem:[#allocation5 + $0x60] sm:$0xff]
        %v1852 = vld [vmem:[#allocation5 + $0x68] sm:$0xff]
        %v1853 = vld [vmem:[#allocation5 + $0x70] sm:$0xff]
        %v1854 = vld [vmem:[#allocation5 + $0x78] sm:$0xff]
        %v1855 = vpack.c.bf16 %v1809, %v1807
        %v1856 = vpack.c.bf16 %v1810, %v1808
        %v1857 = vpack.c.bf16 %v1813, %v1811
        %v1858 = vpack.c.bf16 %v1814, %v1812
        %v1859 = vpack.c.bf16 %v1817, %v1815
        %v1860 = vpack.c.bf16 %v1818, %v1816
        %v1861 = vpack.c.bf16 %v1821, %v1819
        %v1862 = vpack.c.bf16 %v1822, %v1820
        %v1863 = vpack.c.bf16 %v1825, %v1823
        %v1864 = vpack.c.bf16 %v1826, %v1824
        %v1865 = vpack.c.bf16 %v1829, %v1827
        %v1866 = vpack.c.bf16 %v1830, %v1828
        %v1867 = vpack.c.bf16 %v1833, %v1831
        %v1868 = vpack.c.bf16 %v1834, %v1832
        %v1869 = vpack.c.bf16 %v1837, %v1835
        %v1870 = vpack.c.bf16 %v1838, %v1836
        %v1871 = vld [vmem:[%s241] sm:$0xf]
        %v1872 = vld [vmem:[%s241 + $0x4] sm:$0xf]
        %v1873 = vld [vmem:[%s241 + $0x8] sm:$0xf]
        %v1874 = vld [vmem:[%s241 + $0xc] sm:$0xf]
        %v1875 = vld [vmem:[%s241 + $0x10] sm:$0xf]
        %v1876 = vld [vmem:[%s241 + $0x14] sm:$0xf]
        %v1877 = vld [vmem:[%s241 + $0x18] sm:$0xf]
        %v1878 = vld [vmem:[%s241 + $0x1c] sm:$0xf]
        %v1879 = vld [vmem:[%s241 + $0x20] sm:$0xf]
        %v1880 = vld [vmem:[%s241 + $0x24] sm:$0xf]
        %v1881 = vld [vmem:[%s241 + $0x28] sm:$0xf]
        %v1882 = vld [vmem:[%s241 + $0x2c] sm:$0xf]
        %v1883 = vld [vmem:[%s241 + $0x30] sm:$0xf]
        %v1884 = vld [vmem:[%s241 + $0x34] sm:$0xf]
        %v1885 = vld [vmem:[%s241 + $0x38] sm:$0xf]
        %v1886 = vld [vmem:[%s241 + $0x3c] sm:$0xf]
        %v1887 = vld [vmem:[%s241 + $0x40] sm:$0xf]
        %v1888 = vld [vmem:[%s241 + $0x44] sm:$0xf]
        %v1889 = vld [vmem:[%s241 + $0x48] sm:$0xf]
        %v1890 = vld [vmem:[%s241 + $0x4c] sm:$0xf]
        %v1891 = vld [vmem:[%s241 + $0x50] sm:$0xf]
        %v1892 = vld [vmem:[%s241 + $0x54] sm:$0xf]
        %v1893 = vld [vmem:[%s241 + $0x58] sm:$0xf]
        %v1894 = vld [vmem:[%s241 + $0x5c] sm:$0xf]
        %v1895 = vld [vmem:[%s241 + $0x60] sm:$0xf]
        %v1896 = vld [vmem:[%s241 + $0x64] sm:$0xf]
        %v1897 = vld [vmem:[%s241 + $0x68] sm:$0xf]
        %v1898 = vld [vmem:[%s241 + $0x6c] sm:$0xf]
        %v1899 = vld [vmem:[%s241 + $0x70] sm:$0xf]
        %v1900 = vld [vmem:[%s241 + $0x74] sm:$0xf]
        %v1901 = vld [vmem:[%s241 + $0x78] sm:$0xf]
        %v1902 = vld [vmem:[%s241 + $0x7c] sm:$0xf]
        %v1935 = vunpack.c.l.b16 %v1871
        %v1936 = vunpack.c.l.b16 %v1872
        %v1937 = vunpack.c.l.b16 %v1873
        %v1938 = vunpack.c.l.b16 %v1874
        %v1939 = vunpack.c.l.b16 %v1875
        %v1940 = vunpack.c.l.b16 %v1876
        %v1941 = vunpack.c.l.b16 %v1877
        %v1942 = vunpack.c.l.b16 %v1878
        %v1943 = vunpack.c.l.b16 %v1879
        %v1944 = vunpack.c.l.b16 %v1880
        %v1945 = vunpack.c.l.b16 %v1881
        %v1946 = vunpack.c.l.b16 %v1882
        %v1947 = vunpack.c.l.b16 %v1883
        %v1948 = vunpack.c.l.b16 %v1884
        %v1949 = vunpack.c.l.b16 %v1885
        %v1950 = vunpack.c.l.b16 %v1886
        %v1951 = vunpack.c.l.b16 %v1887
        %v1952 = vunpack.c.l.b16 %v1888
        %v1953 = vunpack.c.l.b16 %v1889
        %v1954 = vunpack.c.l.b16 %v1890
        %v1955 = vunpack.c.l.b16 %v1891
        %v1956 = vunpack.c.l.b16 %v1892
        %v1957 = vunpack.c.l.b16 %v1893
        %v1958 = vunpack.c.l.b16 %v1894
        %v1959 = vunpack.c.l.b16 %v1895
        %v1960 = vunpack.c.l.b16 %v1896
        %v1961 = vunpack.c.l.b16 %v1897
        %v1962 = vunpack.c.l.b16 %v1898
        %v1963 = vunpack.c.l.b16 %v1899
        %v1964 = vunpack.c.l.b16 %v1900
        %v1965 = vunpack.c.l.b16 %v1901
        %v1966 = vunpack.c.l.b16 %v1902
        %v1967 = vpack.c.b16 %v1936, %v1935
        %v1968 = vpack.c.b16 %v1938, %v1937
        %v1969 = vpack.c.b16 %v1940, %v1939
        %v1970 = vpack.c.b16 %v1942, %v1941
        %v1971 = vpack.c.b16 %v1944, %v1943
        %v1972 = vpack.c.b16 %v1946, %v1945
        %v1973 = vpack.c.b16 %v1948, %v1947
        %v1974 = vpack.c.b16 %v1950, %v1949
        %v1975 = vpack.c.b16 %v1952, %v1951
        %v1976 = vpack.c.b16 %v1954, %v1953
        %v1977 = vpack.c.b16 %v1956, %v1955
        %v1978 = vpack.c.b16 %v1958, %v1957
        %v1979 = vpack.c.b16 %v1960, %v1959
        %v1980 = vpack.c.b16 %v1962, %v1961
        %v1981 = vpack.c.b16 %v1964, %v1963
        %v1982 = vpack.c.b16 %v1966, %v1965
        %1999 = vmatprep.subr.bf16.mxu0 0
        %2000 = vmatpush1.bf16.msra.mxu0 %v1967
        %2001 = vmatprep.subr.bf16.mxu0 0
        %2002 = vmatpush1.bf16.msra.mxu0 %v1968
        %2003 = vmatprep.subr.bf16.mxu0 0
        %2004 = vmatpush1.bf16.msra.mxu0 %v1969
        %2005 = vmatprep.subr.bf16.mxu0 0
        %2006 = vmatpush1.bf16.msra.mxu0 %v1970
        %2007 = vmatprep.subr.bf16.mxu0 0
        %2008 = vmatpush1.bf16.msra.mxu0 %v1971
        %2009 = vmatprep.subr.bf16.mxu0 0
        %2010 = vmatpush1.bf16.msra.mxu0 %v1972
        %2011 = vmatprep.subr.bf16.mxu0 0
        %2012 = vmatpush1.bf16.msra.mxu0 %v1973
        %2013 = vmatprep.subr.bf16.mxu0 0
        %2014 = vmatpush1.bf16.msra.mxu0 %v1974
        %2015 = vmatprep.subr.bf16.mxu0 0
        %2016 = vmatpush1.bf16.msra.mxu0 %v1975
        %2017 = vmatprep.subr.bf16.mxu0 0
        %2018 = vmatpush1.bf16.msra.mxu0 %v1976
        %2019 = vmatprep.subr.bf16.mxu0 0
        %2020 = vmatpush1.bf16.msra.mxu0 %v1977
        %2021 = vmatprep.subr.bf16.mxu0 0
        %2022 = vmatpush1.bf16.msra.mxu0 %v1978
        %2023 = vmatprep.subr.bf16.mxu0 0
        %2024 = vmatpush1.bf16.msra.mxu0 %v1979
        %2025 = vmatprep.subr.bf16.mxu0 0
        %2026 = vmatpush1.bf16.msra.mxu0 %v1980
        %2027 = vmatprep.subr.bf16.mxu0 0
        %2028 = vmatpush1.bf16.msra.mxu0 %v1981
        %2029 = vmatprep.subr.bf16.mxu0 0
        %2030 = vmatpush1.bf16.msra.mxu0 %v1982
        %2031 = vmatprep.mubr.bf16.mxu0 %v1856
        %2032 = vmatmul.mubr.bf16.gmra.mrb[0].mxu0 %v1855
        %v2033 = vpop.f32.mrb[0].mxu0
        %v2034 = vadd.f32 0.0, %v2033
        %v2035 = vpop.f32.mrb[0].mxu0
        %v2036 = vpop.f32.mrb[0].mxu0
        %v2037 = vadd.f32 0.0, %v2036
        %v2038 = vpop.f32.mrb[0].mxu0
        %2039 = vmatprep.mubr.bf16.mxu0 %v1858
        %2040 = vmatmul.mubr.bf16.gmra.mrb[0].mxu0 %v1857
        %v2041 = vpop.f32.mrb[0].mxu0
        %v2042 = vadd.f32 0.0, %v2041
        %v2043 = vpop.f32.mrb[0].mxu0
        %v2044 = vpop.f32.mrb[0].mxu0
        %v2045 = vadd.f32 0.0, %v2044
        %v2046 = vpop.f32.mrb[0].mxu0
        %2047 = vmatprep.mubr.bf16.mxu0 %v1860
        %2048 = vmatmul.mubr.bf16.gmra.mrb[0].mxu0 %v1859
        %v2049 = vpop.f32.mrb[0].mxu0
        %v2050 = vadd.f32 0.0, %v2049
        %v2051 = vpop.f32.mrb[0].mxu0
        %v2052 = vpop.f32.mrb[0].mxu0
        %v2053 = vadd.f32 0.0, %v2052
        %v2054 = vpop.f32.mrb[0].mxu0
        %2055 = vmatprep.mubr.bf16.mxu0 %v1862
        %2056 = vmatmul.mubr.bf16.gmra.mrb[0].mxu0 %v1861
        %v2057 = vpop.f32.mrb[0].mxu0
        %v2058 = vadd.f32 0.0, %v2057
        %v2059 = vpop.f32.mrb[0].mxu0
        %v2060 = vpop.f32.mrb[0].mxu0
        %v2061 = vadd.f32 0.0, %v2060
        %v2062 = vpop.f32.mrb[0].mxu0
        %2063 = vmatprep.mubr.bf16.mxu0 %v1864
        %2064 = vmatmul.mubr.bf16.gmra.mrb[0].mxu0 %v1863
        %v2065 = vpop.f32.mrb[0].mxu0
        %v2066 = vadd.f32 0.0, %v2065
        %v2067 = vpop.f32.mrb[0].mxu0
        %v2068 = vpop.f32.mrb[0].mxu0
        %v2069 = vadd.f32 0.0, %v2068
        %v2070 = vpop.f32.mrb[0].mxu0
        %2071 = vmatprep.mubr.bf16.mxu0 %v1866
        %2072 = vmatmul.mubr.bf16.gmra.mrb[0].mxu0 %v1865
        %v2073 = vpop.f32.mrb[0].mxu0
        %v2074 = vadd.f32 0.0, %v2073
        %v2075 = vpop.f32.mrb[0].mxu0
        %v2076 = vpop.f32.mrb[0].mxu0
        %v2077 = vadd.f32 0.0, %v2076
        %v2078 = vpop.f32.mrb[0].mxu0
        %2079 = vmatprep.mubr.bf16.mxu0 %v1868
        %2080 = vmatmul.mubr.bf16.gmra.mrb[0].mxu0 %v1867
        %v2081 = vpop.f32.mrb[0].mxu0
        %v2082 = vadd.f32 0.0, %v2081
        %v2083 = vpop.f32.mrb[0].mxu0
        %v2084 = vpop.f32.mrb[0].mxu0
        %v2085 = vadd.f32 0.0, %v2084
        %v2086 = vpop.f32.mrb[0].mxu0
        %2087 = vmatprep.mubr.bf16.mxu0 %v1870
        %2088 = vmatmul.mubr.bf16.gmra.mrb[0].mxu0 %v1869
        %v2089 = vpop.f32.mrb[0].mxu0
        %v2090 = vadd.f32 0.0, %v2089
        %v2091 = vpop.f32.mrb[0].mxu0
        %v2092 = vpop.f32.mrb[0].mxu0
        %v2093 = vadd.f32 0.0, %v2092
        %v2094 = vpop.f32.mrb[0].mxu0
        %2095 = vdwg.mxu0
        %v2096 = vadd.f32 %v1839, %v2034
        %v2097 = vadd.f32 %v1840, %v2037
        %v2098 = vadd.f32 %v1841, %v2042
        %v2099 = vadd.f32 %v1842, %v2045
        %v2100 = vadd.f32 %v1843, %v2050
        %v2101 = vadd.f32 %v1844, %v2053
        %v2102 = vadd.f32 %v1845, %v2058
        %v2103 = vadd.f32 %v1846, %v2061
        %v2104 = vadd.f32 %v1847, %v2066
        %v2105 = vadd.f32 %v1848, %v2069
        %v2106 = vadd.f32 %v1849, %v2074
        %v2107 = vadd.f32 %v1850, %v2077
        %v2108 = vadd.f32 %v1851, %v2082
        %v2109 = vadd.f32 %v1852, %v2085
        %v2110 = vadd.f32 %v1853, %v2090
        %v2111 = vadd.f32 %v1854, %v2093
        %2112 = vst [vmem:[#allocation5] sm:$0xff] %v2096
        %2113 = vst [vmem:[#allocation5 + $0x8] sm:$0xff] %v2097
        %2114 = vst [vmem:[#allocation5 + $0x10] sm:$0xff] %v2098
        %2115 = vst [vmem:[#allocation5 + $0x18] sm:$0xff] %v2099
        %2116 = vst [vmem:[#allocation5 + $0x20] sm:$0xff] %v2100
        %2117 = vst [vmem:[#allocation5 + $0x28] sm:$0xff] %v2101
        %2118 = vst [vmem:[#allocation5 + $0x30] sm:$0xff] %v2102
        %2119 = vst [vmem:[#allocation5 + $0x38] sm:$0xff] %v2103
        %2120 = vst [vmem:[#allocation5 + $0x40] sm:$0xff] %v2104
        %2121 = vst [vmem:[#allocation5 + $0x48] sm:$0xff] %v2105
        %2122 = vst [vmem:[#allocation5 + $0x50] sm:$0xff] %v2106
        %2123 = vst [vmem:[#allocation5 + $0x58] sm:$0xff] %v2107
        %2124 = vst [vmem:[#allocation5 + $0x60] sm:$0xff] %v2108
        %2125 = vst [vmem:[#allocation5 + $0x68] sm:$0xff] %v2109
        %2126 = vst [vmem:[#allocation5 + $0x70] sm:$0xff] %v2110
        %2127 = vst [vmem:[#allocation5 + $0x78] sm:$0xff] %v2111
        %p2128 = scmp.eq.s32.totalorder %s27, 1
        // Predicated region
        $region45: #{tpu_custom_call.1} parent=35 // pred_check
          %p2129 = pneg %p2128
        $region46: #{tpu_custom_call.1} parent=35 // pred_check_branch
          %2131 = sbr.rel (%p2129) target = $region48
        $region47: #{tpu_custom_call.1} parent=35 // pred_region
          %v2132 = vld [vmem:[#allocation5] sm:$0xff]
          %v2133 = vld [vmem:[#allocation5 + $0x8] sm:$0xff]
          %v2134 = vld [vmem:[#allocation5 + $0x10] sm:$0xff]
          %v2135 = vld [vmem:[#allocation5 + $0x18] sm:$0xff]
          %v2136 = vld [vmem:[#allocation5 + $0x20] sm:$0xff]
          %v2137 = vld [vmem:[#allocation5 + $0x28] sm:$0xff]
          %v2138 = vld [vmem:[#allocation5 + $0x30] sm:$0xff]
          %v2139 = vld [vmem:[#allocation5 + $0x38] sm:$0xff]
          %v2140 = vld [vmem:[#allocation5 + $0x40] sm:$0xff]
          %v2141 = vld [vmem:[#allocation5 + $0x48] sm:$0xff]
          %v2142 = vld [vmem:[#allocation5 + $0x50] sm:$0xff]
          %v2143 = vld [vmem:[#allocation5 + $0x58] sm:$0xff]
          %v2144 = vld [vmem:[#allocation5 + $0x60] sm:$0xff]
          %v2145 = vld [vmem:[#allocation5 + $0x68] sm:$0xff]
          %v2146 = vld [vmem:[#allocation5 + $0x70] sm:$0xff]
          %v2147 = vld [vmem:[#allocation5 + $0x78] sm:$0xff]
          %v2148 = vpack.c.bf16 %v2133, %v2132
          %v2149 = vpack.c.bf16 %v2135, %v2134
          %v2150 = vpack.c.bf16 %v2137, %v2136
          %v2151 = vpack.c.bf16 %v2139, %v2138
          %v2152 = vpack.c.bf16 %v2141, %v2140
          %v2153 = vpack.c.bf16 %v2143, %v2142
          %v2154 = vpack.c.bf16 %v2145, %v2144
          %v2155 = vpack.c.bf16 %v2147, %v2146
          %v2156 = vld [vmem:[%s2] sm:$0xf]
          %v2157 = vld [vmem:[%s2 + $0x4] sm:$0xf]
          %v2158 = vld [vmem:[%s2 + $0x8] sm:$0xf]
          %v2159 = vld [vmem:[%s2 + $0xc] sm:$0xf]
          %v2160 = vld [vmem:[%s2 + $0x10] sm:$0xf]
          %v2161 = vld [vmem:[%s2 + $0x14] sm:$0xf]
          %v2162 = vld [vmem:[%s2 + $0x18] sm:$0xf]
          %v2163 = vld [vmem:[%s2 + $0x1c] sm:$0xf]
          %v2164 = vld [vmem:[%s2 + $0x20] sm:$0xf]
          %v2165 = vld [vmem:[%s2 + $0x24] sm:$0xf]
          %v2166 = vld [vmem:[%s2 + $0x28] sm:$0xf]
          %v2167 = vld [vmem:[%s2 + $0x2c] sm:$0xf]
          %v2168 = vld [vmem:[%s2 + $0x30] sm:$0xf]
          %v2169 = vld [vmem:[%s2 + $0x34] sm:$0xf]
          %v2170 = vld [vmem:[%s2 + $0x38] sm:$0xf]
          %v2171 = vld [vmem:[%s2 + $0x3c] sm:$0xf]
          %v2172 = vld [vmem:[%s3] sm:$0x1]
          %v2174 = vlaneseq
          %v2175 = vshrl.u32 %v2174, 7
          %v2176 = vsub.s32 0, %v2175
          %v2177 = vrot.slane %v2172, %v2176
          %v2195 = vunpack.c.l.b16 %v2156
          %v2196 = vunpack.c.l.b16 %v2157
          %v2197 = vunpack.c.l.b16 %v2158
          %v2198 = vunpack.c.l.b16 %v2159
          %v2199 = vunpack.c.l.b16 %v2160
          %v2200 = vunpack.c.l.b16 %v2161
          %v2201 = vunpack.c.l.b16 %v2162
          %v2202 = vunpack.c.l.b16 %v2163
          %v2203 = vunpack.c.l.b16 %v2164
          %v2204 = vunpack.c.l.b16 %v2165
          %v2205 = vunpack.c.l.b16 %v2166
          %v2206 = vunpack.c.l.b16 %v2167
          %v2207 = vunpack.c.l.b16 %v2168
          %v2208 = vunpack.c.l.b16 %v2169
          %v2209 = vunpack.c.l.b16 %v2170
          %v2210 = vunpack.c.l.b16 %v2171
          %v2211 = vpack.c.b16 %v2196, %v2195
          %v2212 = vpack.c.b16 %v2198, %v2197
          %v2213 = vpack.c.b16 %v2200, %v2199
          %v2214 = vpack.c.b16 %v2202, %v2201
          %v2215 = vpack.c.b16 %v2204, %v2203
          %v2216 = vpack.c.b16 %v2206, %v2205
          %v2217 = vpack.c.b16 %v2208, %v2207
          %v2218 = vpack.c.b16 %v2210, %v2209
          %2227 = vmatprep.subr.bf16.mxu0 0
          %2228 = vmatpush1.bf16.msra.mxu0 %v2211
          %2229 = vmatprep.subr.bf16.mxu0 0
          %2230 = vmatpush1.bf16.msra.mxu0 %v2212
          %2231 = vmatprep.subr.bf16.mxu0 0
          %2232 = vmatpush1.bf16.msra.mxu0 %v2213
          %2233 = vmatprep.subr.bf16.mxu0 0
          %2234 = vmatpush1.bf16.msra.mxu0 %v2214
          %2235 = vmatprep.subr.bf16.mxu0 0
          %2236 = vmatpush1.bf16.msra.mxu0 %v2215
          %2237 = vmatprep.subr.bf16.mxu0 0
          %2238 = vmatpush1.bf16.msra.mxu0 %v2216
          %2239 = vmatprep.subr.bf16.mxu0 0
          %2240 = vmatpush1.bf16.msra.mxu0 %v2217
          %2241 = vmatprep.subr.bf16.mxu0 0
          %2242 = vmatpush1.bf16.msra.mxu0 %v2218
          %2243 = vmatprep.subr.bf16.mxu0 0
          %2244 = vmatpush1.bf16.msra.mxu0 0
          %2245 = vmatprep.subr.bf16.mxu0 0
          %2246 = vmatpush1.bf16.msra.mxu0 0
          %2247 = vmatprep.subr.bf16.mxu0 0
          %2248 = vmatpush1.bf16.msra.mxu0 0
          %2249 = vmatprep.subr.bf16.mxu0 0
          %2250 = vmatpush1.bf16.msra.mxu0 0
          %2251 = vmatprep.subr.bf16.mxu0 0
          %2252 = vmatpush1.bf16.msra.mxu0 0
          %2253 = vmatprep.subr.bf16.mxu0 0
          %2254 = vmatpush1.bf16.msra.mxu0 0
          %2255 = vmatprep.subr.bf16.mxu0 0
          %2256 = vmatpush1.bf16.msra.mxu0 0
          %2257 = vmatprep.subr.bf16.mxu0 0
          %2258 = vmatpush1.bf16.msra.mxu0 0
          %2259 = vmatprep.mubr.bf16.mxu0 0
          %2260 = vmatmul.mubr.bf16.gmra.mrb[0].mxu0 %v2148
          %v2261 = vpop.f32.mrb[0].mxu0
          %v2262 = vadd.f32 %v2177, %v2261
          %v2263 = vpop.f32.mrb[0].mxu0
          %v2264 = vpop.f32.mrb[0].mxu0
          %v2265 = vadd.f32 %v2177, %v2264
          %v2266 = vpop.f32.mrb[0].mxu0
          %2267 = vmatprep.mubr.bf16.mxu0 0
          %2268 = vmatmul.mubr.bf16.gmra.mrb[0].mxu0 %v2149
          %v2269 = vpop.f32.mrb[0].mxu0
          %v2270 = vadd.f32 %v2177, %v2269
          %v2271 = vpop.f32.mrb[0].mxu0
          %v2272 = vpop.f32.mrb[0].mxu0
          %v2273 = vadd.f32 %v2177, %v2272
          %v2274 = vpop.f32.mrb[0].mxu0
          %2275 = vmatprep.mubr.bf16.mxu0 0
          %2276 = vmatmul.mubr.bf16.gmra.mrb[0].mxu0 %v2150
          %v2277 = vpop.f32.mrb[0].mxu0
          %v2278 = vadd.f32 %v2177, %v2277
          %v2279 = vpop.f32.mrb[0].mxu0
          %v2280 = vpop.f32.mrb[0].mxu0
          %v2281 = vadd.f32 %v2177, %v2280
          %v2282 = vpop.f32.mrb[0].mxu0
          %2283 = vmatprep.mubr.bf16.mxu0 0
          %2284 = vmatmul.mubr.bf16.gmra.mrb[0].mxu0 %v2151
          %v2285 = vpop.f32.mrb[0].mxu0
          %v2286 = vadd.f32 %v2177, %v2285
          %v2287 = vpop.f32.mrb[0].mxu0
          %v2288 = vpop.f32.mrb[0].mxu0
          %v2289 = vadd.f32 %v2177, %v2288
          %v2290 = vpop.f32.mrb[0].mxu0
          %2291 = vmatprep.mubr.bf16.mxu0 0
          %2292 = vmatmul.mubr.bf16.gmra.mrb[0].mxu0 %v2152
          %v2293 = vpop.f32.mrb[0].mxu0
          %v2294 = vadd.f32 %v2177, %v2293
          %v2295 = vpop.f32.mrb[0].mxu0
          %v2296 = vpop.f32.mrb[0].mxu0
          %v2297 = vadd.f32 %v2177, %v2296
          %v2298 = vpop.f32.mrb[0].mxu0
          %2299 = vmatprep.mubr.bf16.mxu0 0
          %2300 = vmatmul.mubr.bf16.gmra.mrb[0].mxu0 %v2153
          %v2301 = vpop.f32.mrb[0].mxu0
          %v2302 = vadd.f32 %v2177, %v2301
          %v2303 = vpop.f32.mrb[0].mxu0
          %v2304 = vpop.f32.mrb[0].mxu0
          %v2305 = vadd.f32 %v2177, %v2304
          %v2306 = vpop.f32.mrb[0].mxu0
          %2307 = vmatprep.mubr.bf16.mxu0 0
          %2308 = vmatmul.mubr.bf16.gmra.mrb[0].mxu0 %v2154
          %v2309 = vpop.f32.mrb[0].mxu0
          %v2310 = vadd.f32 %v2177, %v2309
          %v2311 = vpop.f32.mrb[0].mxu0
          %v2312 = vpop.f32.mrb[0].mxu0
          %v2313 = vadd.f32 %v2177, %v2312
          %v2314 = vpop.f32.mrb[0].mxu0
          %2315 = vmatprep.mubr.bf16.mxu0 0
          %2316 = vmatmul.mubr.bf16.gmra.mrb[0].mxu0 %v2155
          %v2317 = vpop.f32.mrb[0].mxu0
          %v2318 = vadd.f32 %v2177, %v2317
          %v2319 = vpop.f32.mrb[0].mxu0
          %v2320 = vpop.f32.mrb[0].mxu0
          %v2321 = vadd.f32 %v2177, %v2320
          %v2322 = vpop.f32.mrb[0].mxu0
          %2323 = vdwg.mxu0
          %v2324 = vmax.f32 %v2262, 0.0
          %v2325 = vmax.f32 %v2265, 0.0
          %v2326 = vmax.f32 %v2270, 0.0
          %v2327 = vmax.f32 %v2273, 0.0
          %v2328 = vmax.f32 %v2278, 0.0
          %v2329 = vmax.f32 %v2281, 0.0
          %v2330 = vmax.f32 %v2286, 0.0
          %v2331 = vmax.f32 %v2289, 0.0
          %v2332 = vmax.f32 %v2294, 0.0
          %v2333 = vmax.f32 %v2297, 0.0
          %v2334 = vmax.f32 %v2302, 0.0
          %v2335 = vmax.f32 %v2305, 0.0
          %v2336 = vmax.f32 %v2310, 0.0
          %v2337 = vmax.f32 %v2313, 0.0
          %v2338 = vmax.f32 %v2318, 0.0
          %v2339 = vmax.f32 %v2321, 0.0
          %2340 = vst [vmem:[#allocation6] sm:$0xff] %v2324
          %2341 = vst [vmem:[#allocation6 + $0x8] sm:$0xff] %v2325
          %2342 = vst [vmem:[#allocation6 + $0x10] sm:$0xff] %v2326
          %2343 = vst [vmem:[#allocation6 + $0x18] sm:$0xff] %v2327
          %2344 = vst [vmem:[#allocation6 + $0x20] sm:$0xff] %v2328
          %2345 = vst [vmem:[#allocation6 + $0x28] sm:$0xff] %v2329
          %2346 = vst [vmem:[#allocation6 + $0x30] sm:$0xff] %v2330
          %2347 = vst [vmem:[#allocation6 + $0x38] sm:$0xff] %v2331
          %2348 = vst [vmem:[#allocation6 + $0x40] sm:$0xff] %v2332
          %2349 = vst [vmem:[#allocation6 + $0x48] sm:$0xff] %v2333
          %2350 = vst [vmem:[#allocation6 + $0x50] sm:$0xff] %v2334
          %2351 = vst [vmem:[#allocation6 + $0x58] sm:$0xff] %v2335
          %2352 = vst [vmem:[#allocation6 + $0x60] sm:$0xff] %v2336
          %2353 = vst [vmem:[#allocation6 + $0x68] sm:$0xff] %v2337
          %2354 = vst [vmem:[#allocation6 + $0x70] sm:$0xff] %v2338
          %2355 = vst [vmem:[#allocation6 + $0x78] sm:$0xff] %v2339
        $region48: #{tpu_custom_call.1} parent=35 // pred_fallthru
          _
        // Predicated region
        $region49: #{tpu_custom_call.1} parent=35 // pred_check
          %p2356 = pneg %p146
        $region50: #{tpu_custom_call.1} parent=35 // pred_check_branch
          %2358 = sbr.rel (%p2356) target = $region52
        $region51: #{tpu_custom_call.1} parent=35 // pred_region
          %s2359 = smul.u32 16, %s26
          %s2361 = ssub.s32 2048, 2048
          %2362 = vsyncadd [#allocation4], %s2361
          %s2363 = smul.addr %s2359, 128
          %s2364 = scalar_lea.hbm %s4, %s2363
          %s2365 = sshll.u32 [#allocation5], 4
          %s2366 = int_to_ptr.vmem [resolvable:$true] %s2365
          %2371 = dma.vmem_to_hbm [thread:$0]  %s2366, 2048, %s2364, [#allocation4], 128, 128, 8
        $region52: #{tpu_custom_call.1} parent=35 // pred_fallthru
          _
        // Predicated region
        $region53: #{tpu_custom_call.1} parent=35 // pred_check
          %p2372 = pneg %p172
        $region54: #{tpu_custom_call.1} parent=35 // pred_check_branch
          %2374 = sbr.rel (%p2372) target = $region56
        $region55: #{tpu_custom_call.1} parent=35 // pred_region
          %s2375 = smul.u32 16, %s26
          %s2377 = ssub.s32 2048, 2048
          %2378 = vsyncadd [#allocation7], %s2377
          %s2379 = smul.addr %s2375, 128
          %s2380 = scalar_lea.hbm %s5, %s2379
          %s2381 = sshll.u32 [#allocation6], 4
          %s2382 = int_to_ptr.vmem [resolvable:$true] %s2381
          %2387 = dma.vmem_to_hbm [thread:$0]  %s2382, 2048, %s2380, [#allocation7], 128, 128, 8
        $region56: #{tpu_custom_call.1} parent=35 // pred_fallthru
          _
        // Predicated region
        $region57: #{tpu_custom_call.1} parent=35 // pred_check
          %p2388 = pneg %p146
        $region58: #{tpu_custom_call.1} parent=35 // pred_check_branch
          %2390 = sbr.rel (%p2388) target = $region60
        $region59: #{tpu_custom_call.1} parent=35 // pred_region
          %2391 = dma.done [#allocation4], 2048
        $region60: #{tpu_custom_call.1} parent=35 // pred_fallthru
          _
        // Predicated region
        $region61: #{tpu_custom_call.1} parent=35 // pred_check
          %p2392 = pneg %p172
        $region62: #{tpu_custom_call.1} parent=35 // pred_check_branch
          %2394 = sbr.rel (%p2392) target = $region64
        $region63: #{tpu_custom_call.1} parent=35 // pred_region
          %2395 = dma.done [#allocation7], 2048
        $region64: #{tpu_custom_call.1} parent=35 // pred_fallthru
          _
      $region36: #{tpu_custom_call.1} parent=5 // pred_fallthru
        _
      %p2396 = scmp.le.s32.totalorder 2, %s17
      // Predicated region
      $region65: #{tpu_custom_call.1} parent=5 // pred_check
        %p2397 = pneg %p2396
      $region66: #{tpu_custom_call.1} parent=5 // pred_check_branch
        %2399 = sbr.rel (%p2397) target = $region68
      $region67: #{tpu_custom_call.1} parent=5 // pred_region
        %s2400 = ssub.s32 %s17, 2
      $region68: #{tpu_custom_call.1} parent=5 // pred_fallthru
        _
    $region6: #{tpu_custom_call.1} parent=1 // loop_footer
      %s21 = sadd.s32 1, %s17
    $region7: #{tpu_custom_call.1} parent=1 // loop_footer_branch
      %16 = sbr.rel target = $region3
    $region8: #{tpu_custom_call.1} parent=1 // loop_exit
      _
    %2401 = vsyncpa [#allocation3], 1
    %s2402 = scalar_lea.sflag [#allocation3], 1
    %2403 = vsyncpa %s2402, 1
    %2404 = vsyncpa [#allocation4], 1
    %s2405 = scalar_lea.sflag [#allocation4], 1
    %2406 = vsyncpa %s2405, 1
    %2407 = vsyncpa [#allocation7], 1

</llo_original>
